<compile_context>
chip_gen: v7x
topology: tpu7x:2x2x1
jax: 0.10.0
libtpu: 0.0.40
codegen_flags: <defaults>
</compile_context>

<pallas_src>
import math

import jax
import jax.numpy as jnp
from jax.experimental import pallas as pl
from jax.experimental.pallas import tpu as pltpu


def _sigmoid_mul_lane_dense_kernel(gate_ref, x_ref, o_ref):
    """gate_ref: (R, G); x_ref/o_ref: (R, G*HW) with G*HW a multiple of 128."""
    r, g = gate_ref.shape
    l = x_ref.shape[-1]
    hw = l // g
    s = jax.nn.sigmoid(gate_ref[...].astype(jnp.float32))          # tiny, EUP slot
    # Expand each per-channel gate value across its HW contiguous lanes.
    s = jnp.broadcast_to(s[:, :, None], (r, g, hw)).reshape(r, l)
    # f32 multiply, downcast product (identical for f32 inputs, more accurate for bf16).
    o_ref[...] = (x_ref[...].astype(jnp.float32) * s).astype(o_ref.dtype)


def _sigmoid_mul_rowgate_kernel(gate_ref, x_ref, o_ref):
    """Fallback: gate_ref (NC, 1); x_ref/o_ref (NC, HW). Masked stores when HW<128."""
    s = jax.nn.sigmoid(gate_ref[...].astype(jnp.float32))          # (NC, 1)
    o_ref[...] = (x_ref[...].astype(jnp.float32) * s).astype(o_ref.dtype)


def _row_block(num_rows, bytes_per_row, budget=8 * 1024 * 1024):
    """Rows per grid step: the whole thing if it fits (single step => no per-step
    overhead), otherwise a multiple-of-8 divisor so double-buffered in+out tiles
    stay well under the scoped-VMEM default (32 MiB; v7x physical VMEM is 64 MiB)."""
    per_row = 4 * bytes_per_row          # (in + out) x 2 pipeline buffers
    if num_rows * per_row <= budget:
        return num_rows
    cap = max(8, budget // per_row)
    for d in range((min(num_rows, cap) // 8) * 8, 7, -8):
        if num_rows % d == 0:
            return d
    return num_rows


def sigmoid_mul(x841, x837):
    """x841: (N, C, 1, 1) gate; x837: (N, C, H, W). Returns sigmoid(x841) * x837."""
    N, C, H, W = x837.shape
    assert x841.shape == (N, C, 1, 1)
    NC, HW = N * C, H * W

    # Smallest channel-group G that makes the last dim a multiple of 128 lanes.
    G = 128 // math.gcd(HW, 128)

    if NC % G == 0:
        R, L = NC // G, G * HW
        x2d = x837.reshape(R, L)                  # free, contiguous view
        g2d = x841.reshape(R, G)
        tr = _row_block(R, L * x837.dtype.itemsize)
        try:
            out2d = pl.pallas_call(
                _sigmoid_mul_lane_dense_kernel,
                out_shape=jax.ShapeDtypeStruct((R, L), x837.dtype),
                grid=(R // tr,),
                in_specs=[
                    pl.BlockSpec((tr, G), lambda i: (i, 0)),    # gate tile
                    pl.BlockSpec((tr, L), lambda i: (i, 0)),    # activation tile (lane-dense)
                ],
                out_specs=pl.BlockSpec((tr, L), lambda i: (i, 0)),
                compiler_params=pltpu.CompilerParams(
                    dimension_semantics=("arbitrary",)),
            )(g2d, x2d)
            return out2d.reshape(N, C, H, W)
        except Exception:
            pass  # Mosaic rejected the in-kernel gate expansion -> safe fallback below

    # Fallback: (NC, HW) view, per-row gate broadcast across lanes.  Stores are
    # masked when HW < 128, but this op is overhead-bound, so it stays near-roofline.
    x2d = x837.reshape(NC, HW)
    g2d = x841.reshape(NC, 1)
    out2d = pl.pallas_call(
        _sigmoid_mul_rowgate_kernel,
        out_shape=jax.ShapeDtypeStruct((NC, HW), x837.dtype),
        grid=(1,),
        in_specs=[
            pl.BlockSpec((NC, 1), lambda i: (0, 0)),
            pl.BlockSpec((NC, HW), lambda i: (0, 0)),
        ],
        out_specs=pl.BlockSpec((NC, HW), lambda i: (0, 0)),
        compiler_params=pltpu.CompilerParams(
            dimension_semantics=("arbitrary",)),
    )(g2d, x2d)
    return out2d.reshape(N, C, H, W)


if __name__ == "__main__":
    key = jax.random.PRNGKey(0)
    k1, k2 = jax.random.split(key)

    # Small shapes consistent with the module's forward (NCHW activation + per-channel gate).
    N, C, H, W = 1, 256, 7, 7
    x837 = jax.random.normal(k1, (N, C, H, W), dtype=jnp.float32)
    x841 = jax.random.normal(k2, (N, C, 1, 1), dtype=jnp.float32)

    out = jax.block_until_ready(sigmoid_mul(x841, x837))

    # Cross-check against plain-JAX reference
    ref = jax.nn.sigmoid(x841) * x837
    assert out.shape == ref.shape
    assert jnp.allclose(out, ref, atol=1e-6, rtol=1e-6)

    print("KERNEL_OK")
</pallas_src>

<mosaic_0001>
module attributes {stable_mosaic.version = 11 : i64} {
  func.func @_sigmoid_mul_lane_dense_kernel(%arg0: i32, %arg1: memref<2x128xf32, #tpu.memory_space<vmem>>, %arg2: memref<2x6272xf32, #tpu.memory_space<vmem>>, %arg3: memref<2x6272xf32, #tpu.memory_space<vmem>>) attributes {dimension_semantics = [#tpu.dimension_semantics<arbitrary>], iteration_bounds = array<i64: 1>, scalar_prefetch = 0 : i64, scratch_operands = 0 : i64, tpu.core_type = #tpu.core_type<tc>, window_params = [{transform_indices = @transform_0, window_bounds = array<i64: 2, 128>}, {transform_indices = @transform_1, window_bounds = array<i64: 2, 6272>}, {transform_indices = @transform_2, window_bounds = array<i64: 2, 6272>}]} {
    %c0 = arith.constant 0 : index
    %c0_0 = arith.constant 0 : index
    %0 = vector.load %arg1[%c0, %c0_0] : memref<2x128xf32, #tpu.memory_space<vmem>>, vector<2x128xf32>
    %1 = arith.negf %0 : vector<2x128xf32>
    %2 = math.exp %1 : vector<2x128xf32>
    %cst = arith.constant 1.000000e+00 : f32
    %3 = vector.broadcast %cst : f32 to vector<2x128xf32>
    %4 = arith.addf %3, %2 : vector<2x128xf32>
    %5 = arith.divf %3, %4 : vector<2x128xf32>
    %6 = vector.shape_cast %5 : vector<2x128xf32> to vector<2x128x1xf32>
    %7 = vector.shape_cast %6 : vector<2x128x1xf32> to vector<2x128x1xf32>
    %8 = vector.broadcast %7 : vector<2x128x1xf32> to vector<2x128x49xf32>
    %9 = vector.shape_cast %8 : vector<2x128x49xf32> to vector<2x6272xf32>
    %c0_1 = arith.constant 0 : index
    %c0_2 = arith.constant 0 : index
    %10 = vector.load %arg2[%c0_1, %c0_2] : memref<2x6272xf32, #tpu.memory_space<vmem>>, vector<2x6272xf32>
    %11 = arith.mulf %10, %9 : vector<2x6272xf32>
    %c0_3 = arith.constant 0 : index
    %c0_4 = arith.constant 0 : index
    %12 = vector.load %arg3[%c0_3, %c0_4] : memref<2x6272xf32, #tpu.memory_space<vmem>>, vector<2x6272xf32>
    tpu.vector_store %arg3[%c0_3, %c0_4], %11 {strides = array<i32>} : memref<2x6272xf32, #tpu.memory_space<vmem>>, vector<2x6272xf32>,
    return
  }
  func.func @transform_0(%arg0: i32) -> (i32, i32) {
    %c0_i32 = arith.constant 0 : i32
    %c0_i32_0 = arith.constant 0 : i32
    return %arg0, %c0_i32 : i32, i32
  }
  func.func @transform_1(%arg0: i32) -> (i32, i32) {
    %c0_i32 = arith.constant 0 : i32
    %c0_i32_0 = arith.constant 0 : i32
    return %arg0, %c0_i32 : i32, i32
  }
  func.func @transform_2(%arg0: i32) -> (i32, i32) {
    %c0_i32 = arith.constant 0 : i32
    %c0_i32_0 = arith.constant 0 : i32
    return %arg0, %c0_i32 : i32, i32
  }
}

module attributes {stable_mosaic.version = 11 : i64} {
  func.func @_sigmoid_mul_rowgate_kernel(%arg0: i32, %arg1: memref<256x1xf32, #tpu.memory_space<vmem>>, %arg2: memref<256x49xf32, #tpu.memory_space<vmem>>, %arg3: memref<256x49xf32, #tpu.memory_space<vmem>>) attributes {dimension_semantics = [#tpu.dimension_semantics<arbitrary>], iteration_bounds = array<i64: 1>, scalar_prefetch = 0 : i64, scratch_operands = 0 : i64, tpu.core_type = #tpu.core_type<tc>, window_params = [{pipeline_mode = #tpu.pipeline_mode<synchronous>, transform_indices = @transform_0, window_bounds = array<i64: 256, 1>}, {pipeline_mode = #tpu.pipeline_mode<synchronous>, transform_indices = @transform_1, window_bounds = array<i64: 256, 49>}, {pipeline_mode = #tpu.pipeline_mode<synchronous>, transform_indices = @transform_2, window_bounds = array<i64: 256, 49>}]} {
    %c0 = arith.constant 0 : index
    %c0_0 = arith.constant 0 : index
    %0 = vector.load %arg1[%c0, %c0_0] : memref<256x1xf32, #tpu.memory_space<vmem>>, vector<256x1xf32>
    %1 = arith.negf %0 : vector<256x1xf32>
    %2 = math.exp %1 : vector<256x1xf32>
    %cst = arith.constant 1.000000e+00 : f32
    %3 = vector.broadcast %cst : f32 to vector<256x1xf32>
    %4 = arith.addf %3, %2 : vector<256x1xf32>
    %5 = arith.divf %3, %4 : vector<256x1xf32>
    %c0_1 = arith.constant 0 : index
    %c0_2 = arith.constant 0 : index
    %6 = vector.load %arg2[%c0_1, %c0_2] : memref<256x49xf32, #tpu.memory_space<vmem>>, vector<256x49xf32>
    %7 = vector.broadcast %5 : vector<256x1xf32> to vector<256x49xf32>
    %8 = arith.mulf %6, %7 : vector<256x49xf32>
    %c0_3 = arith.constant 0 : index
    %c0_4 = arith.constant 0 : index
    %9 = vector.load %arg3[%c0_3, %c0_4] : memref<256x49xf32, #tpu.memory_space<vmem>>, vector<256x49xf32>
    tpu.vector_store %arg3[%c0_3, %c0_4], %8 {strides = array<i32>} : memref<256x49xf32, #tpu.memory_space<vmem>>, vector<256x49xf32>,
    return
  }
  func.func @transform_0(%arg0: i32) -> (i32, i32) {
    %c0_i32 = arith.constant 0 : i32
    %c0_i32_0 = arith.constant 0 : i32
    %c0_i32_1 = arith.constant 0 : i32
    return %c0_i32, %c0_i32_0 : i32, i32
  }
  func.func @transform_1(%arg0: i32) -> (i32, i32) {
    %c0_i32 = arith.constant 0 : i32
    %c0_i32_0 = arith.constant 0 : i32
    %c0_i32_1 = arith.constant 0 : i32
    return %c0_i32, %c0_i32_0 : i32, i32
  }
  func.func @transform_2(%arg0: i32) -> (i32, i32) {
    %c0_i32 = arith.constant 0 : i32
    %c0_i32_0 = arith.constant 0 : i32
    %c0_i32_1 = arith.constant 0 : i32
    return %c0_i32, %c0_i32_0 : i32, i32
  }
}

</mosaic_0001>

<llo_original>
// kernel: tpu_custom_call.1
$region0: #{tpu_custom_call.1}
  #allocation0 [shape = 'u32[]', space=smem, size = 0x4, offset = 0x4, fixed_abs, tag = 'smem constant byte address 0x4 - core index']
  #allocation1 [shape = 'u32[144,128]{1,0:T(1,128)}', space=vmem, size = 0x12000, scoped, tag = 'internal scratch']
  %s0 = inlined_call_operand.hbm [shape: f32[2,128], index: 0, kind: input, shape index: {}]
  %s1 = inlined_call_operand.hbm [shape: f32[2,6272], index: 1, kind: input, shape index: {}]
  %s2 = inlined_call_operand.hbm [shape: f32[2,6272], index: 2, kind: output, shape index: {}]
  %s3 = sld [smem:[#allocation0]]
  $region26: #{tpu_custom_call.1} parent=0
    _
  %s5 = ssub.s32 1, %s3
  %s6 = scalar_select 0, %s5, %s3
  $region1: #{tpu_custom_call.1} parent=0
    #allocation2 [shape = 'u8[1024]{0}', space=vmem, size = 0x400, scoped, tag = 'input window, operand 0, single buffered']
    #allocation3 [shape = 's32[1]{0}', space=sflag, size = 0x4, scoped, tag = 'scoped memory for tpu_custom_call.1']
    #allocation4 [shape = 's32[1]{0}', space=sflag, size = 0x4, scoped, tag = 'scoped memory for tpu_custom_call.1']
    #allocation5 [shape = 'u8[50176]{0}', space=vmem, size = 0xc400, scoped, tag = 'input window, operand 1, single buffered']
    #allocation6 [shape = 's32[1]{0}', space=sflag, size = 0x4, scoped, tag = 'scoped memory for tpu_custom_call.1']
    #allocation7 [shape = 'u8[50176]{0}', space=vmem, size = 0xc400, scoped, tag = 'output window, operand 0, single buffered']
    %7 = vsyncpa [#allocation3], 0
    %8 = vsyncpa [#allocation6], 0
    %9 = vsyncpa [#allocation4], 0
    // Predicated region
    $region2: #{tpu_custom_call.1} parent=1 // pred_check
      _
    $region3: #{tpu_custom_call.1} parent=1 // pred_check_branch
      %11 = sbr.rel (0) target = $region5
    $region4: #{tpu_custom_call.1} parent=1 // pred_region
      %s13 = ssub.s32 32, 32
      %14 = vsyncadd [#allocation3], %s13
      %s16 = sshll.u32 [#allocation2], 4
      %s17 = int_to_ptr.vmem [resolvable:$true] %s16
      %19 = dma.hbm_to_vmem [thread:$0]  %s0, 32, %s17, [#allocation3]
    $region5: #{tpu_custom_call.1} parent=1 // pred_fallthru
      _
    // Predicated region
    $region6: #{tpu_custom_call.1} parent=1 // pred_check
      _
    $region7: #{tpu_custom_call.1} parent=1 // pred_check_branch
      %21 = sbr.rel (0) target = $region9
    $region8: #{tpu_custom_call.1} parent=1 // pred_region
      %s23 = ssub.s32 1568, 1568
      %24 = vsyncadd [#allocation6], %s23
      %s26 = sshll.u32 [#allocation5], 4
      %s27 = int_to_ptr.vmem [resolvable:$true] %s26
      %29 = dma.hbm_to_vmem [thread:$0]  %s1, 1568, %s27, [#allocation6]
    $region9: #{tpu_custom_call.1} parent=1 // pred_fallthru
      _
    // Predicated region
    $region10: #{tpu_custom_call.1} parent=1 // pred_check
      _
    $region11: #{tpu_custom_call.1} parent=1 // pred_check_branch
      %31 = sbr.rel (0) target = $region13
    $region12: #{tpu_custom_call.1} parent=1 // pred_region
      %32 = dma.done [#allocation3], 32
    $region13: #{tpu_custom_call.1} parent=1 // pred_fallthru
      _
    // Predicated region
    $region14: #{tpu_custom_call.1} parent=1 // pred_check
      _
    $region15: #{tpu_custom_call.1} parent=1 // pred_check_branch
      %34 = sbr.rel (0) target = $region17
    $region16: #{tpu_custom_call.1} parent=1 // pred_region
      %35 = dma.done [#allocation6], 1568
    $region17: #{tpu_custom_call.1} parent=1 // pred_fallthru
      _
    %v36 = vld [vmem:[#allocation2] sm:$0x3]
    %v37 = vxor.u32 %v36, 2147483648
    %v38 = vmul.f32 %v37, 1.442695
    %v39 = vpow.pop %v38
    %v40 = vadd.f32 %v39, 1.0
    %v41 = vrcp.pop %v40
    %v42 = vmul.f32 1.0, %v41
    %v43 = vlaneseq
    %v44 = vshrl.u32 %v43, 7
    %v45 = vsub.s32 0, %v44
    %v46 = vrot.slane %v42, %v45
    %48 = vbcast.lane.b32.xlu0 %v46, 256
    %v49 = vpop.permute.xlu0 %48
    %s51 = sor.u32 256, 8
    %52 = vbcast.lane.b32.xlu0 %v46, %s51
    %v53 = vpop.permute.xlu0 %52
    %s55 = sor.u32 256, 16
    %56 = vbcast.lane.b32.xlu0 %v46, %s55
    %v57 = vpop.permute.xlu0 %56
    %s59 = sor.u32 256, 24
    %60 = vbcast.lane.b32.xlu0 %v46, %s59
    %v61 = vpop.permute.xlu0 %60
    %s63 = sor.u32 256, 32
    %64 = vbcast.lane.b32.xlu0 %v46, %s63
    %v65 = vpop.permute.xlu0 %64
    %s67 = sor.u32 256, 40
    %68 = vbcast.lane.b32.xlu0 %v46, %s67
    %v69 = vpop.permute.xlu0 %68
    %s71 = sor.u32 256, 48
    %72 = vbcast.lane.b32.xlu0 %v46, %s71
    %v73 = vpop.permute.xlu0 %72
    %s75 = sor.u32 256, 56
    %76 = vbcast.lane.b32.xlu0 %v46, %s75
    %v77 = vpop.permute.xlu0 %76
    %s79 = sor.u32 256, 64
    %80 = vbcast.lane.b32.xlu0 %v46, %s79
    %v81 = vpop.permute.xlu0 %80
    %s83 = sor.u32 256, 72
    %84 = vbcast.lane.b32.xlu0 %v46, %s83
    %v85 = vpop.permute.xlu0 %84
    %s87 = sor.u32 256, 80
    %88 = vbcast.lane.b32.xlu0 %v46, %s87
    %v89 = vpop.permute.xlu0 %88
    %s91 = sor.u32 256, 88
    %92 = vbcast.lane.b32.xlu0 %v46, %s91
    %v93 = vpop.permute.xlu0 %92
    %s95 = sor.u32 256, 96
    %96 = vbcast.lane.b32.xlu0 %v46, %s95
    %v97 = vpop.permute.xlu0 %96
    %s99 = sor.u32 256, 104
    %100 = vbcast.lane.b32.xlu0 %v46, %s99
    %v101 = vpop.permute.xlu0 %100
    %s103 = sor.u32 256, 112
    %104 = vbcast.lane.b32.xlu0 %v46, %s103
    %v105 = vpop.permute.xlu0 %104
    %s107 = sor.u32 256, 120
    %108 = vbcast.lane.b32.xlu0 %v46, %s107
    %v109 = vpop.permute.xlu0 %108
    %v110 = vlaneseq
    %v111 = vshrl.u32 %v110, 7
    %v112 = vsub.s32 1, %v111
    %v113 = vrot.slane %v42, %v112
    %115 = vbcast.lane.b32.xlu0 %v113, 256
    %v116 = vpop.permute.xlu0 %115
    %s118 = sor.u32 256, 8
    %119 = vbcast.lane.b32.xlu0 %v113, %s118
    %v120 = vpop.permute.xlu0 %119
    %s122 = sor.u32 256, 16
    %123 = vbcast.lane.b32.xlu0 %v113, %s122
    %v124 = vpop.permute.xlu0 %123
    %s126 = sor.u32 256, 24
    %127 = vbcast.lane.b32.xlu0 %v113, %s126
    %v128 = vpop.permute.xlu0 %127
    %s130 = sor.u32 256, 32
    %131 = vbcast.lane.b32.xlu0 %v113, %s130
    %v132 = vpop.permute.xlu0 %131
    %s134 = sor.u32 256, 40
    %135 = vbcast.lane.b32.xlu0 %v113, %s134
    %v136 = vpop.permute.xlu0 %135
    %s138 = sor.u32 256, 48
    %139 = vbcast.lane.b32.xlu0 %v113, %s138
    %v140 = vpop.permute.xlu0 %139
    %s142 = sor.u32 256, 56
    %143 = vbcast.lane.b32.xlu0 %v113, %s142
    %v144 = vpop.permute.xlu0 %143
    %s146 = sor.u32 256, 64
    %147 = vbcast.lane.b32.xlu0 %v113, %s146
    %v148 = vpop.permute.xlu0 %147
    %s150 = sor.u32 256, 72
    %151 = vbcast.lane.b32.xlu0 %v113, %s150
    %v152 = vpop.permute.xlu0 %151
    %s154 = sor.u32 256, 80
    %155 = vbcast.lane.b32.xlu0 %v113, %s154
    %v156 = vpop.permute.xlu0 %155
    %s158 = sor.u32 256, 88
    %159 = vbcast.lane.b32.xlu0 %v113, %s158
    %v160 = vpop.permute.xlu0 %159
    %s162 = sor.u32 256, 96
    %163 = vbcast.lane.b32.xlu0 %v113, %s162
    %v164 = vpop.permute.xlu0 %163
    %s166 = sor.u32 256, 104
    %167 = vbcast.lane.b32.xlu0 %v113, %s166
    %v168 = vpop.permute.xlu0 %167
    %s170 = sor.u32 256, 112
    %171 = vbcast.lane.b32.xlu0 %v113, %s170
    %v172 = vpop.permute.xlu0 %171
    %s174 = sor.u32 256, 120
    %175 = vbcast.lane.b32.xlu0 %v113, %s174
    %v176 = vpop.permute.xlu0 %175
    %v177 = vcombine.high %v49, 0.0
    %v179 = vunpack.c.l.s4 1983009808
    %v180 = vunpack.c.0.s8 %v179
    %v181 = vlaneseq
    %v182 = vshrl.u32 %v181, 7
    %v183 = vsub.s32 %v180, %v182
    %v184 = vrot.slane %v49, %v183
    %v186 = vunpack.c.l.s4 1983009808
    %v187 = vunpack.c.0.s8 %v186
    %v188 = vlaneseq
    %v189 = vshrl.u32 %v188, 7
    %v190 = vsub.s32 %v187, %v189
    %v191 = vrot.slane %v177, %v190
    %v192 = vcombine.high %v116, 0.0
    %v194 = vunpack.c.l.s4 1983009808
    %v195 = vunpack.c.0.s8 %v194
    %v196 = vlaneseq
    %v197 = vshrl.u32 %v196, 7
    %v198 = vsub.s32 %v195, %v197
    %v199 = vrot.slane %v116, %v198
    %v201 = vunpack.c.l.s4 1983009808
    %v202 = vunpack.c.0.s8 %v201
    %v203 = vlaneseq
    %v204 = vshrl.u32 %v203, 7
    %v205 = vsub.s32 %v202, %v204
    %v206 = vrot.slane %v192, %v205
    %v207 = vcombine.low %v184, %v199
    %v208 = vcombine.high %v184, %v199
    %v210 = vunpack.c.l.s4 1934713408
    %v211 = vunpack.c.0.s8 %v210
    %v212 = vlaneseq
    %v213 = vshrl.u32 %v212, 7
    %v214 = vsub.s32 %v211, %v213
    %v215 = vrot.slane %v207, %v214
    %v217 = vunpack.c.l.s4 1934713408
    %v218 = vunpack.c.0.s8 %v217
    %v219 = vlaneseq
    %v220 = vshrl.u32 %v219, 7
    %v221 = vsub.s32 %v218, %v220
    %v222 = vrot.slane %v208, %v221
    %v223 = vcombine.low %v191, %v206
    %v224 = vcombine.high %v191, %v206
    %v226 = vunpack.c.l.s4 1934713408
    %v227 = vunpack.c.0.s8 %v226
    %v228 = vlaneseq
    %v229 = vshrl.u32 %v228, 7
    %v230 = vsub.s32 %v227, %v229
    %v231 = vrot.slane %v223, %v230
    %v233 = vunpack.c.l.s4 1934713408
    %v234 = vunpack.c.0.s8 %v233
    %v235 = vlaneseq
    %v236 = vshrl.u32 %v235, 7
    %v237 = vsub.s32 %v234, %v236
    %v238 = vrot.slane %v224, %v237
    %v239 = vcombine.high %v215, 0.0
    %v240 = vcombine.high %v222, 0.0
    %v241 = vcombine.high %v231, 0.0
    %v242 = vcombine.high %v238, 0.0
    %v243 = vcombine.high %v53, 0.0
    %v245 = vunpack.c.l.s4 1983009808
    %v246 = vunpack.c.0.s8 %v245
    %v247 = vlaneseq
    %v248 = vshrl.u32 %v247, 7
    %v249 = vsub.s32 %v246, %v248
    %v250 = vrot.slane %v53, %v249
    %v252 = vunpack.c.l.s4 1983009808
    %v253 = vunpack.c.0.s8 %v252
    %v254 = vlaneseq
    %v255 = vshrl.u32 %v254, 7
    %v256 = vsub.s32 %v253, %v255
    %v257 = vrot.slane %v243, %v256
    %v258 = vcombine.high %v120, 0.0
    %v260 = vunpack.c.l.s4 1983009808
    %v261 = vunpack.c.0.s8 %v260
    %v262 = vlaneseq
    %v263 = vshrl.u32 %v262, 7
    %v264 = vsub.s32 %v261, %v263
    %v265 = vrot.slane %v120, %v264
    %v267 = vunpack.c.l.s4 1983009808
    %v268 = vunpack.c.0.s8 %v267
    %v269 = vlaneseq
    %v270 = vshrl.u32 %v269, 7
    %v271 = vsub.s32 %v268, %v270
    %v272 = vrot.slane %v258, %v271
    %v273 = vcombine.low %v250, %v265
    %v274 = vcombine.high %v250, %v265
    %v276 = vunpack.c.l.s4 1934713408
    %v277 = vunpack.c.0.s8 %v276
    %v278 = vlaneseq
    %v279 = vshrl.u32 %v278, 7
    %v280 = vsub.s32 %v277, %v279
    %v281 = vrot.slane %v273, %v280
    %v283 = vunpack.c.l.s4 1934713408
    %v284 = vunpack.c.0.s8 %v283
    %v285 = vlaneseq
    %v286 = vshrl.u32 %v285, 7
    %v287 = vsub.s32 %v284, %v286
    %v288 = vrot.slane %v274, %v287
    %v289 = vcombine.low %v257, %v272
    %v290 = vcombine.high %v257, %v272
    %v292 = vunpack.c.l.s4 1934713408
    %v293 = vunpack.c.0.s8 %v292
    %v294 = vlaneseq
    %v295 = vshrl.u32 %v294, 7
    %v296 = vsub.s32 %v293, %v295
    %v297 = vrot.slane %v289, %v296
    %v299 = vunpack.c.l.s4 1934713408
    %v300 = vunpack.c.0.s8 %v299
    %v301 = vlaneseq
    %v302 = vshrl.u32 %v301, 7
    %v303 = vsub.s32 %v300, %v302
    %v304 = vrot.slane %v290, %v303
    %v305 = vcombine.high %v281, 0.0
    %v306 = vcombine.high %v288, 0.0
    %v307 = vcombine.high %v297, 0.0
    %v308 = vcombine.high %v304, 0.0
    %v309 = vcombine.high %v57, 0.0
    %v311 = vunpack.c.l.s4 1983009808
    %v312 = vunpack.c.0.s8 %v311
    %v313 = vlaneseq
    %v314 = vshrl.u32 %v313, 7
    %v315 = vsub.s32 %v312, %v314
    %v316 = vrot.slane %v57, %v315
    %v318 = vunpack.c.l.s4 1983009808
    %v319 = vunpack.c.0.s8 %v318
    %v320 = vlaneseq
    %v321 = vshrl.u32 %v320, 7
    %v322 = vsub.s32 %v319, %v321
    %v323 = vrot.slane %v309, %v322
    %v324 = vcombine.high %v124, 0.0
    %v326 = vunpack.c.l.s4 1983009808
    %v327 = vunpack.c.0.s8 %v326
    %v328 = vlaneseq
    %v329 = vshrl.u32 %v328, 7
    %v330 = vsub.s32 %v327, %v329
    %v331 = vrot.slane %v124, %v330
    %v333 = vunpack.c.l.s4 1983009808
    %v334 = vunpack.c.0.s8 %v333
    %v335 = vlaneseq
    %v336 = vshrl.u32 %v335, 7
    %v337 = vsub.s32 %v334, %v336
    %v338 = vrot.slane %v324, %v337
    %v339 = vcombine.low %v316, %v331
    %v340 = vcombine.high %v316, %v331
    %v342 = vunpack.c.l.s4 1934713408
    %v343 = vunpack.c.0.s8 %v342
    %v344 = vlaneseq
    %v345 = vshrl.u32 %v344, 7
    %v346 = vsub.s32 %v343, %v345
    %v347 = vrot.slane %v339, %v346
    %v349 = vunpack.c.l.s4 1934713408
    %v350 = vunpack.c.0.s8 %v349
    %v351 = vlaneseq
    %v352 = vshrl.u32 %v351, 7
    %v353 = vsub.s32 %v350, %v352
    %v354 = vrot.slane %v340, %v353
    %v355 = vcombine.low %v323, %v338
    %v356 = vcombine.high %v323, %v338
    %v358 = vunpack.c.l.s4 1934713408
    %v359 = vunpack.c.0.s8 %v358
    %v360 = vlaneseq
    %v361 = vshrl.u32 %v360, 7
    %v362 = vsub.s32 %v359, %v361
    %v363 = vrot.slane %v355, %v362
    %v365 = vunpack.c.l.s4 1934713408
    %v366 = vunpack.c.0.s8 %v365
    %v367 = vlaneseq
    %v368 = vshrl.u32 %v367, 7
    %v369 = vsub.s32 %v366, %v368
    %v370 = vrot.slane %v356, %v369
    %v371 = vcombine.high %v347, 0.0
    %v372 = vcombine.high %v354, 0.0
    %v373 = vcombine.high %v363, 0.0
    %v374 = vcombine.high %v370, 0.0
    %v375 = vcombine.high %v61, 0.0
    %v377 = vunpack.c.l.s4 1983009808
    %v378 = vunpack.c.0.s8 %v377
    %v379 = vlaneseq
    %v380 = vshrl.u32 %v379, 7
    %v381 = vsub.s32 %v378, %v380
    %v382 = vrot.slane %v61, %v381
    %v384 = vunpack.c.l.s4 1983009808
    %v385 = vunpack.c.0.s8 %v384
    %v386 = vlaneseq
    %v387 = vshrl.u32 %v386, 7
    %v388 = vsub.s32 %v385, %v387
    %v389 = vrot.slane %v375, %v388
    %v390 = vcombine.high %v128, 0.0
    %v392 = vunpack.c.l.s4 1983009808
    %v393 = vunpack.c.0.s8 %v392
    %v394 = vlaneseq
    %v395 = vshrl.u32 %v394, 7
    %v396 = vsub.s32 %v393, %v395
    %v397 = vrot.slane %v128, %v396
    %v399 = vunpack.c.l.s4 1983009808
    %v400 = vunpack.c.0.s8 %v399
    %v401 = vlaneseq
    %v402 = vshrl.u32 %v401, 7
    %v403 = vsub.s32 %v400, %v402
    %v404 = vrot.slane %v390, %v403
    %v405 = vcombine.low %v382, %v397
    %v406 = vcombine.high %v382, %v397
    %v408 = vunpack.c.l.s4 1934713408
    %v409 = vunpack.c.0.s8 %v408
    %v410 = vlaneseq
    %v411 = vshrl.u32 %v410, 7
    %v412 = vsub.s32 %v409, %v411
    %v413 = vrot.slane %v405, %v412
    %v415 = vunpack.c.l.s4 1934713408
    %v416 = vunpack.c.0.s8 %v415
    %v417 = vlaneseq
    %v418 = vshrl.u32 %v417, 7
    %v419 = vsub.s32 %v416, %v418
    %v420 = vrot.slane %v406, %v419
    %v421 = vcombine.low %v389, %v404
    %v422 = vcombine.high %v389, %v404
    %v424 = vunpack.c.l.s4 1934713408
    %v425 = vunpack.c.0.s8 %v424
    %v426 = vlaneseq
    %v427 = vshrl.u32 %v426, 7
    %v428 = vsub.s32 %v425, %v427
    %v429 = vrot.slane %v421, %v428
    %v431 = vunpack.c.l.s4 1934713408
    %v432 = vunpack.c.0.s8 %v431
    %v433 = vlaneseq
    %v434 = vshrl.u32 %v433, 7
    %v435 = vsub.s32 %v432, %v434
    %v436 = vrot.slane %v422, %v435
    %v437 = vcombine.high %v413, 0.0
    %v438 = vcombine.high %v420, 0.0
    %v439 = vcombine.high %v429, 0.0
    %v440 = vcombine.high %v436, 0.0
    %v441 = vcombine.high %v65, 0.0
    %v443 = vunpack.c.l.s4 1983009808
    %v444 = vunpack.c.0.s8 %v443
    %v445 = vlaneseq
    %v446 = vshrl.u32 %v445, 7
    %v447 = vsub.s32 %v444, %v446
    %v448 = vrot.slane %v65, %v447
    %v450 = vunpack.c.l.s4 1983009808
    %v451 = vunpack.c.0.s8 %v450
    %v452 = vlaneseq
    %v453 = vshrl.u32 %v452, 7
    %v454 = vsub.s32 %v451, %v453
    %v455 = vrot.slane %v441, %v454
    %v456 = vcombine.high %v132, 0.0
    %v458 = vunpack.c.l.s4 1983009808
    %v459 = vunpack.c.0.s8 %v458
    %v460 = vlaneseq
    %v461 = vshrl.u32 %v460, 7
    %v462 = vsub.s32 %v459, %v461
    %v463 = vrot.slane %v132, %v462
    %v465 = vunpack.c.l.s4 1983009808
    %v466 = vunpack.c.0.s8 %v465
    %v467 = vlaneseq
    %v468 = vshrl.u32 %v467, 7
    %v469 = vsub.s32 %v466, %v468
    %v470 = vrot.slane %v456, %v469
    %v471 = vcombine.low %v448, %v463
    %v472 = vcombine.high %v448, %v463
    %v474 = vunpack.c.l.s4 1934713408
    %v475 = vunpack.c.0.s8 %v474
    %v476 = vlaneseq
    %v477 = vshrl.u32 %v476, 7
    %v478 = vsub.s32 %v475, %v477
    %v479 = vrot.slane %v471, %v478
    %v481 = vunpack.c.l.s4 1934713408
    %v482 = vunpack.c.0.s8 %v481
    %v483 = vlaneseq
    %v484 = vshrl.u32 %v483, 7
    %v485 = vsub.s32 %v482, %v484
    %v486 = vrot.slane %v472, %v485
    %v487 = vcombine.low %v455, %v470
    %v488 = vcombine.high %v455, %v470
    %v490 = vunpack.c.l.s4 1934713408
    %v491 = vunpack.c.0.s8 %v490
    %v492 = vlaneseq
    %v493 = vshrl.u32 %v492, 7
    %v494 = vsub.s32 %v491, %v493
    %v495 = vrot.slane %v487, %v494
    %v497 = vunpack.c.l.s4 1934713408
    %v498 = vunpack.c.0.s8 %v497
    %v499 = vlaneseq
    %v500 = vshrl.u32 %v499, 7
    %v501 = vsub.s32 %v498, %v500
    %v502 = vrot.slane %v488, %v501
    %v503 = vcombine.high %v479, 0.0
    %v504 = vcombine.high %v486, 0.0
    %v505 = vcombine.high %v495, 0.0
    %v506 = vcombine.high %v502, 0.0
    %v507 = vcombine.high %v69, 0.0
    %v509 = vunpack.c.l.s4 1983009808
    %v510 = vunpack.c.0.s8 %v509
    %v511 = vlaneseq
    %v512 = vshrl.u32 %v511, 7
    %v513 = vsub.s32 %v510, %v512
    %v514 = vrot.slane %v69, %v513
    %v516 = vunpack.c.l.s4 1983009808
    %v517 = vunpack.c.0.s8 %v516
    %v518 = vlaneseq
    %v519 = vshrl.u32 %v518, 7
    %v520 = vsub.s32 %v517, %v519
    %v521 = vrot.slane %v507, %v520
    %v522 = vcombine.high %v136, 0.0
    %v524 = vunpack.c.l.s4 1983009808
    %v525 = vunpack.c.0.s8 %v524
    %v526 = vlaneseq
    %v527 = vshrl.u32 %v526, 7
    %v528 = vsub.s32 %v525, %v527
    %v529 = vrot.slane %v136, %v528
    %v531 = vunpack.c.l.s4 1983009808
    %v532 = vunpack.c.0.s8 %v531
    %v533 = vlaneseq
    %v534 = vshrl.u32 %v533, 7
    %v535 = vsub.s32 %v532, %v534
    %v536 = vrot.slane %v522, %v535
    %v537 = vcombine.low %v514, %v529
    %v538 = vcombine.high %v514, %v529
    %v540 = vunpack.c.l.s4 1934713408
    %v541 = vunpack.c.0.s8 %v540
    %v542 = vlaneseq
    %v543 = vshrl.u32 %v542, 7
    %v544 = vsub.s32 %v541, %v543
    %v545 = vrot.slane %v537, %v544
    %v547 = vunpack.c.l.s4 1934713408
    %v548 = vunpack.c.0.s8 %v547
    %v549 = vlaneseq
    %v550 = vshrl.u32 %v549, 7
    %v551 = vsub.s32 %v548, %v550
    %v552 = vrot.slane %v538, %v551
    %v553 = vcombine.low %v521, %v536
    %v554 = vcombine.high %v521, %v536
    %v556 = vunpack.c.l.s4 1934713408
    %v557 = vunpack.c.0.s8 %v556
    %v558 = vlaneseq
    %v559 = vshrl.u32 %v558, 7
    %v560 = vsub.s32 %v557, %v559
    %v561 = vrot.slane %v553, %v560
    %v563 = vunpack.c.l.s4 1934713408
    %v564 = vunpack.c.0.s8 %v563
    %v565 = vlaneseq
    %v566 = vshrl.u32 %v565, 7
    %v567 = vsub.s32 %v564, %v566
    %v568 = vrot.slane %v554, %v567
    %v569 = vcombine.high %v545, 0.0
    %v570 = vcombine.high %v552, 0.0
    %v571 = vcombine.high %v561, 0.0
    %v572 = vcombine.high %v568, 0.0
    %v573 = vcombine.high %v73, 0.0
    %v575 = vunpack.c.l.s4 1983009808
    %v576 = vunpack.c.0.s8 %v575
    %v577 = vlaneseq
    %v578 = vshrl.u32 %v577, 7
    %v579 = vsub.s32 %v576, %v578
    %v580 = vrot.slane %v73, %v579
    %v582 = vunpack.c.l.s4 1983009808
    %v583 = vunpack.c.0.s8 %v582
    %v584 = vlaneseq
    %v585 = vshrl.u32 %v584, 7
    %v586 = vsub.s32 %v583, %v585
    %v587 = vrot.slane %v573, %v586
    %v588 = vcombine.high %v140, 0.0
    %v590 = vunpack.c.l.s4 1983009808
    %v591 = vunpack.c.0.s8 %v590
    %v592 = vlaneseq
    %v593 = vshrl.u32 %v592, 7
    %v594 = vsub.s32 %v591, %v593
    %v595 = vrot.slane %v140, %v594
    %v597 = vunpack.c.l.s4 1983009808
    %v598 = vunpack.c.0.s8 %v597
    %v599 = vlaneseq
    %v600 = vshrl.u32 %v599, 7
    %v601 = vsub.s32 %v598, %v600
    %v602 = vrot.slane %v588, %v601
    %v603 = vcombine.low %v580, %v595
    %v604 = vcombine.high %v580, %v595
    %v606 = vunpack.c.l.s4 1934713408
    %v607 = vunpack.c.0.s8 %v606
    %v608 = vlaneseq
    %v609 = vshrl.u32 %v608, 7
    %v610 = vsub.s32 %v607, %v609
    %v611 = vrot.slane %v603, %v610
    %v613 = vunpack.c.l.s4 1934713408
    %v614 = vunpack.c.0.s8 %v613
    %v615 = vlaneseq
    %v616 = vshrl.u32 %v615, 7
    %v617 = vsub.s32 %v614, %v616
    %v618 = vrot.slane %v604, %v617
    %v619 = vcombine.low %v587, %v602
    %v620 = vcombine.high %v587, %v602
    %v622 = vunpack.c.l.s4 1934713408
    %v623 = vunpack.c.0.s8 %v622
    %v624 = vlaneseq
    %v625 = vshrl.u32 %v624, 7
    %v626 = vsub.s32 %v623, %v625
    %v627 = vrot.slane %v619, %v626
    %v629 = vunpack.c.l.s4 1934713408
    %v630 = vunpack.c.0.s8 %v629
    %v631 = vlaneseq
    %v632 = vshrl.u32 %v631, 7
    %v633 = vsub.s32 %v630, %v632
    %v634 = vrot.slane %v620, %v633
    %v635 = vcombine.high %v611, 0.0
    %v636 = vcombine.high %v618, 0.0
    %v637 = vcombine.high %v627, 0.0
    %v638 = vcombine.high %v634, 0.0
    %v639 = vcombine.high %v77, 0.0
    %v641 = vunpack.c.l.s4 1983009808
    %v642 = vunpack.c.0.s8 %v641
    %v643 = vlaneseq
    %v644 = vshrl.u32 %v643, 7
    %v645 = vsub.s32 %v642, %v644
    %v646 = vrot.slane %v77, %v645
    %v648 = vunpack.c.l.s4 1983009808
    %v649 = vunpack.c.0.s8 %v648
    %v650 = vlaneseq
    %v651 = vshrl.u32 %v650, 7
    %v652 = vsub.s32 %v649, %v651
    %v653 = vrot.slane %v639, %v652
    %v654 = vcombine.high %v144, 0.0
    %v656 = vunpack.c.l.s4 1983009808
    %v657 = vunpack.c.0.s8 %v656
    %v658 = vlaneseq
    %v659 = vshrl.u32 %v658, 7
    %v660 = vsub.s32 %v657, %v659
    %v661 = vrot.slane %v144, %v660
    %v663 = vunpack.c.l.s4 1983009808
    %v664 = vunpack.c.0.s8 %v663
    %v665 = vlaneseq
    %v666 = vshrl.u32 %v665, 7
    %v667 = vsub.s32 %v664, %v666
    %v668 = vrot.slane %v654, %v667
    %v669 = vcombine.low %v646, %v661
    %v670 = vcombine.high %v646, %v661
    %v672 = vunpack.c.l.s4 1934713408
    %v673 = vunpack.c.0.s8 %v672
    %v674 = vlaneseq
    %v675 = vshrl.u32 %v674, 7
    %v676 = vsub.s32 %v673, %v675
    %v677 = vrot.slane %v669, %v676
    %v679 = vunpack.c.l.s4 1934713408
    %v680 = vunpack.c.0.s8 %v679
    %v681 = vlaneseq
    %v682 = vshrl.u32 %v681, 7
    %v683 = vsub.s32 %v680, %v682
    %v684 = vrot.slane %v670, %v683
    %v685 = vcombine.low %v653, %v668
    %v686 = vcombine.high %v653, %v668
    %v688 = vunpack.c.l.s4 1934713408
    %v689 = vunpack.c.0.s8 %v688
    %v690 = vlaneseq
    %v691 = vshrl.u32 %v690, 7
    %v692 = vsub.s32 %v689, %v691
    %v693 = vrot.slane %v685, %v692
    %v695 = vunpack.c.l.s4 1934713408
    %v696 = vunpack.c.0.s8 %v695
    %v697 = vlaneseq
    %v698 = vshrl.u32 %v697, 7
    %v699 = vsub.s32 %v696, %v698
    %v700 = vrot.slane %v686, %v699
    %v701 = vcombine.high %v677, 0.0
    %v702 = vcombine.high %v684, 0.0
    %v703 = vcombine.high %v693, 0.0
    %v704 = vcombine.high %v700, 0.0
    %v705 = vcombine.high %v81, 0.0
    %v707 = vunpack.c.l.s4 1983009808
    %v708 = vunpack.c.0.s8 %v707
    %v709 = vlaneseq
    %v710 = vshrl.u32 %v709, 7
    %v711 = vsub.s32 %v708, %v710
    %v712 = vrot.slane %v81, %v711
    %v714 = vunpack.c.l.s4 1983009808
    %v715 = vunpack.c.0.s8 %v714
    %v716 = vlaneseq
    %v717 = vshrl.u32 %v716, 7
    %v718 = vsub.s32 %v715, %v717
    %v719 = vrot.slane %v705, %v718
    %v720 = vcombine.high %v148, 0.0
    %v722 = vunpack.c.l.s4 1983009808
    %v723 = vunpack.c.0.s8 %v722
    %v724 = vlaneseq
    %v725 = vshrl.u32 %v724, 7
    %v726 = vsub.s32 %v723, %v725
    %v727 = vrot.slane %v148, %v726
    %v729 = vunpack.c.l.s4 1983009808
    %v730 = vunpack.c.0.s8 %v729
    %v731 = vlaneseq
    %v732 = vshrl.u32 %v731, 7
    %v733 = vsub.s32 %v730, %v732
    %v734 = vrot.slane %v720, %v733
    %v735 = vcombine.low %v712, %v727
    %v736 = vcombine.high %v712, %v727
    %v738 = vunpack.c.l.s4 1934713408
    %v739 = vunpack.c.0.s8 %v738
    %v740 = vlaneseq
    %v741 = vshrl.u32 %v740, 7
    %v742 = vsub.s32 %v739, %v741
    %v743 = vrot.slane %v735, %v742
    %v745 = vunpack.c.l.s4 1934713408
    %v746 = vunpack.c.0.s8 %v745
    %v747 = vlaneseq
    %v748 = vshrl.u32 %v747, 7
    %v749 = vsub.s32 %v746, %v748
    %v750 = vrot.slane %v736, %v749
    %v751 = vcombine.low %v719, %v734
    %v752 = vcombine.high %v719, %v734
    %v754 = vunpack.c.l.s4 1934713408
    %v755 = vunpack.c.0.s8 %v754
    %v756 = vlaneseq
    %v757 = vshrl.u32 %v756, 7
    %v758 = vsub.s32 %v755, %v757
    %v759 = vrot.slane %v751, %v758
    %v761 = vunpack.c.l.s4 1934713408
    %v762 = vunpack.c.0.s8 %v761
    %v763 = vlaneseq
    %v764 = vshrl.u32 %v763, 7
    %v765 = vsub.s32 %v762, %v764
    %v766 = vrot.slane %v752, %v765
    %v767 = vcombine.high %v743, 0.0
    %v768 = vcombine.high %v750, 0.0
    %v769 = vcombine.high %v759, 0.0
    %v770 = vcombine.high %v766, 0.0
    %v771 = vcombine.high %v85, 0.0
    %v773 = vunpack.c.l.s4 1983009808
    %v774 = vunpack.c.0.s8 %v773
    %v775 = vlaneseq
    %v776 = vshrl.u32 %v775, 7
    %v777 = vsub.s32 %v774, %v776
    %v778 = vrot.slane %v85, %v777
    %v780 = vunpack.c.l.s4 1983009808
    %v781 = vunpack.c.0.s8 %v780
    %v782 = vlaneseq
    %v783 = vshrl.u32 %v782, 7
    %v784 = vsub.s32 %v781, %v783
    %v785 = vrot.slane %v771, %v784
    %v786 = vcombine.high %v152, 0.0
    %v788 = vunpack.c.l.s4 1983009808
    %v789 = vunpack.c.0.s8 %v788
    %v790 = vlaneseq
    %v791 = vshrl.u32 %v790, 7
    %v792 = vsub.s32 %v789, %v791
    %v793 = vrot.slane %v152, %v792
    %v795 = vunpack.c.l.s4 1983009808
    %v796 = vunpack.c.0.s8 %v795
    %v797 = vlaneseq
    %v798 = vshrl.u32 %v797, 7
    %v799 = vsub.s32 %v796, %v798
    %v800 = vrot.slane %v786, %v799
    %v801 = vcombine.low %v778, %v793
    %v802 = vcombine.high %v778, %v793
    %v804 = vunpack.c.l.s4 1934713408
    %v805 = vunpack.c.0.s8 %v804
    %v806 = vlaneseq
    %v807 = vshrl.u32 %v806, 7
    %v808 = vsub.s32 %v805, %v807
    %v809 = vrot.slane %v801, %v808
    %v811 = vunpack.c.l.s4 1934713408
    %v812 = vunpack.c.0.s8 %v811
    %v813 = vlaneseq
    %v814 = vshrl.u32 %v813, 7
    %v815 = vsub.s32 %v812, %v814
    %v816 = vrot.slane %v802, %v815
    %v817 = vcombine.low %v785, %v800
    %v818 = vcombine.high %v785, %v800
    %v820 = vunpack.c.l.s4 1934713408
    %v821 = vunpack.c.0.s8 %v820
    %v822 = vlaneseq
    %v823 = vshrl.u32 %v822, 7
    %v824 = vsub.s32 %v821, %v823
    %v825 = vrot.slane %v817, %v824
    %v827 = vunpack.c.l.s4 1934713408
    %v828 = vunpack.c.0.s8 %v827
    %v829 = vlaneseq
    %v830 = vshrl.u32 %v829, 7
    %v831 = vsub.s32 %v828, %v830
    %v832 = vrot.slane %v818, %v831
    %v833 = vcombine.high %v809, 0.0
    %v834 = vcombine.high %v816, 0.0
    %v835 = vcombine.high %v825, 0.0
    %v836 = vcombine.high %v832, 0.0
    %v837 = vcombine.high %v89, 0.0
    %v839 = vunpack.c.l.s4 1983009808
    %v840 = vunpack.c.0.s8 %v839
    %v841 = vlaneseq
    %v842 = vshrl.u32 %v841, 7
    %v843 = vsub.s32 %v840, %v842
    %v844 = vrot.slane %v89, %v843
    %v846 = vunpack.c.l.s4 1983009808
    %v847 = vunpack.c.0.s8 %v846
    %v848 = vlaneseq
    %v849 = vshrl.u32 %v848, 7
    %v850 = vsub.s32 %v847, %v849
    %v851 = vrot.slane %v837, %v850
    %v852 = vcombine.high %v156, 0.0
    %v854 = vunpack.c.l.s4 1983009808
    %v855 = vunpack.c.0.s8 %v854
    %v856 = vlaneseq
    %v857 = vshrl.u32 %v856, 7
    %v858 = vsub.s32 %v855, %v857
    %v859 = vrot.slane %v156, %v858
    %v861 = vunpack.c.l.s4 1983009808
    %v862 = vunpack.c.0.s8 %v861
    %v863 = vlaneseq
    %v864 = vshrl.u32 %v863, 7
    %v865 = vsub.s32 %v862, %v864
    %v866 = vrot.slane %v852, %v865
    %v867 = vcombine.low %v844, %v859
    %v868 = vcombine.high %v844, %v859
    %v870 = vunpack.c.l.s4 1934713408
    %v871 = vunpack.c.0.s8 %v870
    %v872 = vlaneseq
    %v873 = vshrl.u32 %v872, 7
    %v874 = vsub.s32 %v871, %v873
    %v875 = vrot.slane %v867, %v874
    %v877 = vunpack.c.l.s4 1934713408
    %v878 = vunpack.c.0.s8 %v877
    %v879 = vlaneseq
    %v880 = vshrl.u32 %v879, 7
    %v881 = vsub.s32 %v878, %v880
    %v882 = vrot.slane %v868, %v881
    %v883 = vcombine.low %v851, %v866
    %v884 = vcombine.high %v851, %v866
    %v886 = vunpack.c.l.s4 1934713408
    %v887 = vunpack.c.0.s8 %v886
    %v888 = vlaneseq
    %v889 = vshrl.u32 %v888, 7
    %v890 = vsub.s32 %v887, %v889
    %v891 = vrot.slane %v883, %v890
    %v893 = vunpack.c.l.s4 1934713408
    %v894 = vunpack.c.0.s8 %v893
    %v895 = vlaneseq
    %v896 = vshrl.u32 %v895, 7
    %v897 = vsub.s32 %v894, %v896
    %v898 = vrot.slane %v884, %v897
    %v899 = vcombine.high %v875, 0.0
    %v900 = vcombine.high %v882, 0.0
    %v901 = vcombine.high %v891, 0.0
    %v902 = vcombine.high %v898, 0.0
    %v903 = vcombine.high %v93, 0.0
    %v905 = vunpack.c.l.s4 1983009808
    %v906 = vunpack.c.0.s8 %v905
    %v907 = vlaneseq
    %v908 = vshrl.u32 %v907, 7
    %v909 = vsub.s32 %v906, %v908
    %v910 = vrot.slane %v93, %v909
    %v912 = vunpack.c.l.s4 1983009808
    %v913 = vunpack.c.0.s8 %v912
    %v914 = vlaneseq
    %v915 = vshrl.u32 %v914, 7
    %v916 = vsub.s32 %v913, %v915
    %v917 = vrot.slane %v903, %v916
    %v918 = vcombine.high %v160, 0.0
    %v920 = vunpack.c.l.s4 1983009808
    %v921 = vunpack.c.0.s8 %v920
    %v922 = vlaneseq
    %v923 = vshrl.u32 %v922, 7
    %v924 = vsub.s32 %v921, %v923
    %v925 = vrot.slane %v160, %v924
    %v927 = vunpack.c.l.s4 1983009808
    %v928 = vunpack.c.0.s8 %v927
    %v929 = vlaneseq
    %v930 = vshrl.u32 %v929, 7
    %v931 = vsub.s32 %v928, %v930
    %v932 = vrot.slane %v918, %v931
    %v933 = vcombine.low %v910, %v925
    %v934 = vcombine.high %v910, %v925
    %v936 = vunpack.c.l.s4 1934713408
    %v937 = vunpack.c.0.s8 %v936
    %v938 = vlaneseq
    %v939 = vshrl.u32 %v938, 7
    %v940 = vsub.s32 %v937, %v939
    %v941 = vrot.slane %v933, %v940
    %v943 = vunpack.c.l.s4 1934713408
    %v944 = vunpack.c.0.s8 %v943
    %v945 = vlaneseq
    %v946 = vshrl.u32 %v945, 7
    %v947 = vsub.s32 %v944, %v946
    %v948 = vrot.slane %v934, %v947
    %v949 = vcombine.low %v917, %v932
    %v950 = vcombine.high %v917, %v932
    %v952 = vunpack.c.l.s4 1934713408
    %v953 = vunpack.c.0.s8 %v952
    %v954 = vlaneseq
    %v955 = vshrl.u32 %v954, 7
    %v956 = vsub.s32 %v953, %v955
    %v957 = vrot.slane %v949, %v956
    %v959 = vunpack.c.l.s4 1934713408
    %v960 = vunpack.c.0.s8 %v959
    %v961 = vlaneseq
    %v962 = vshrl.u32 %v961, 7
    %v963 = vsub.s32 %v960, %v962
    %v964 = vrot.slane %v950, %v963
    %v965 = vcombine.high %v941, 0.0
    %v966 = vcombine.high %v948, 0.0
    %v967 = vcombine.high %v957, 0.0
    %v968 = vcombine.high %v964, 0.0
    %v969 = vcombine.high %v97, 0.0
    %v971 = vunpack.c.l.s4 1983009808
    %v972 = vunpack.c.0.s8 %v971
    %v973 = vlaneseq
    %v974 = vshrl.u32 %v973, 7
    %v975 = vsub.s32 %v972, %v974
    %v976 = vrot.slane %v97, %v975
    %v978 = vunpack.c.l.s4 1983009808
    %v979 = vunpack.c.0.s8 %v978
    %v980 = vlaneseq
    %v981 = vshrl.u32 %v980, 7
    %v982 = vsub.s32 %v979, %v981
    %v983 = vrot.slane %v969, %v982
    %v984 = vcombine.high %v164, 0.0
    %v986 = vunpack.c.l.s4 1983009808
    %v987 = vunpack.c.0.s8 %v986
    %v988 = vlaneseq
    %v989 = vshrl.u32 %v988, 7
    %v990 = vsub.s32 %v987, %v989
    %v991 = vrot.slane %v164, %v990
    %v993 = vunpack.c.l.s4 1983009808
    %v994 = vunpack.c.0.s8 %v993
    %v995 = vlaneseq
    %v996 = vshrl.u32 %v995, 7
    %v997 = vsub.s32 %v994, %v996
    %v998 = vrot.slane %v984, %v997
    %v999 = vcombine.low %v976, %v991
    %v1000 = vcombine.high %v976, %v991
    %v1002 = vunpack.c.l.s4 1934713408
    %v1003 = vunpack.c.0.s8 %v1002
    %v1004 = vlaneseq
    %v1005 = vshrl.u32 %v1004, 7
    %v1006 = vsub.s32 %v1003, %v1005
    %v1007 = vrot.slane %v999, %v1006
    %v1009 = vunpack.c.l.s4 1934713408
    %v1010 = vunpack.c.0.s8 %v1009
    %v1011 = vlaneseq
    %v1012 = vshrl.u32 %v1011, 7
    %v1013 = vsub.s32 %v1010, %v1012
    %v1014 = vrot.slane %v1000, %v1013
    %v1015 = vcombine.low %v983, %v998
    %v1016 = vcombine.high %v983, %v998
    %v1018 = vunpack.c.l.s4 1934713408
    %v1019 = vunpack.c.0.s8 %v1018
    %v1020 = vlaneseq
    %v1021 = vshrl.u32 %v1020, 7
    %v1022 = vsub.s32 %v1019, %v1021
    %v1023 = vrot.slane %v1015, %v1022
    %v1025 = vunpack.c.l.s4 1934713408
    %v1026 = vunpack.c.0.s8 %v1025
    %v1027 = vlaneseq
    %v1028 = vshrl.u32 %v1027, 7
    %v1029 = vsub.s32 %v1026, %v1028
    %v1030 = vrot.slane %v1016, %v1029
    %v1031 = vcombine.high %v1007, 0.0
    %v1032 = vcombine.high %v1014, 0.0
    %v1033 = vcombine.high %v1023, 0.0
    %v1034 = vcombine.high %v1030, 0.0
    %v1035 = vcombine.high %v101, 0.0
    %v1037 = vunpack.c.l.s4 1983009808
    %v1038 = vunpack.c.0.s8 %v1037
    %v1039 = vlaneseq
    %v1040 = vshrl.u32 %v1039, 7
    %v1041 = vsub.s32 %v1038, %v1040
    %v1042 = vrot.slane %v101, %v1041
    %v1044 = vunpack.c.l.s4 1983009808
    %v1045 = vunpack.c.0.s8 %v1044
    %v1046 = vlaneseq
    %v1047 = vshrl.u32 %v1046, 7
    %v1048 = vsub.s32 %v1045, %v1047
    %v1049 = vrot.slane %v1035, %v1048
    %v1050 = vcombine.high %v168, 0.0
    %v1052 = vunpack.c.l.s4 1983009808
    %v1053 = vunpack.c.0.s8 %v1052
    %v1054 = vlaneseq
    %v1055 = vshrl.u32 %v1054, 7
    %v1056 = vsub.s32 %v1053, %v1055
    %v1057 = vrot.slane %v168, %v1056
    %v1059 = vunpack.c.l.s4 1983009808
    %v1060 = vunpack.c.0.s8 %v1059
    %v1061 = vlaneseq
    %v1062 = vshrl.u32 %v1061, 7
    %v1063 = vsub.s32 %v1060, %v1062
    %v1064 = vrot.slane %v1050, %v1063
    %v1065 = vcombine.low %v1042, %v1057
    %v1066 = vcombine.high %v1042, %v1057
    %v1068 = vunpack.c.l.s4 1934713408
    %v1069 = vunpack.c.0.s8 %v1068
    %v1070 = vlaneseq
    %v1071 = vshrl.u32 %v1070, 7
    %v1072 = vsub.s32 %v1069, %v1071
    %v1073 = vrot.slane %v1065, %v1072
    %v1075 = vunpack.c.l.s4 1934713408
    %v1076 = vunpack.c.0.s8 %v1075
    %v1077 = vlaneseq
    %v1078 = vshrl.u32 %v1077, 7
    %v1079 = vsub.s32 %v1076, %v1078
    %v1080 = vrot.slane %v1066, %v1079
    %v1081 = vcombine.low %v1049, %v1064
    %v1082 = vcombine.high %v1049, %v1064
    %v1084 = vunpack.c.l.s4 1934713408
    %v1085 = vunpack.c.0.s8 %v1084
    %v1086 = vlaneseq
    %v1087 = vshrl.u32 %v1086, 7
    %v1088 = vsub.s32 %v1085, %v1087
    %v1089 = vrot.slane %v1081, %v1088
    %v1091 = vunpack.c.l.s4 1934713408
    %v1092 = vunpack.c.0.s8 %v1091
    %v1093 = vlaneseq
    %v1094 = vshrl.u32 %v1093, 7
    %v1095 = vsub.s32 %v1092, %v1094
    %v1096 = vrot.slane %v1082, %v1095
    %v1097 = vcombine.high %v1073, 0.0
    %v1098 = vcombine.high %v1080, 0.0
    %v1099 = vcombine.high %v1089, 0.0
    %v1100 = vcombine.high %v1096, 0.0
    %v1101 = vcombine.high %v105, 0.0
    %v1103 = vunpack.c.l.s4 1983009808
    %v1104 = vunpack.c.0.s8 %v1103
    %v1105 = vlaneseq
    %v1106 = vshrl.u32 %v1105, 7
    %v1107 = vsub.s32 %v1104, %v1106
    %v1108 = vrot.slane %v105, %v1107
    %v1110 = vunpack.c.l.s4 1983009808
    %v1111 = vunpack.c.0.s8 %v1110
    %v1112 = vlaneseq
    %v1113 = vshrl.u32 %v1112, 7
    %v1114 = vsub.s32 %v1111, %v1113
    %v1115 = vrot.slane %v1101, %v1114
    %v1116 = vcombine.high %v172, 0.0
    %v1118 = vunpack.c.l.s4 1983009808
    %v1119 = vunpack.c.0.s8 %v1118
    %v1120 = vlaneseq
    %v1121 = vshrl.u32 %v1120, 7
    %v1122 = vsub.s32 %v1119, %v1121
    %v1123 = vrot.slane %v172, %v1122
    %v1125 = vunpack.c.l.s4 1983009808
    %v1126 = vunpack.c.0.s8 %v1125
    %v1127 = vlaneseq
    %v1128 = vshrl.u32 %v1127, 7
    %v1129 = vsub.s32 %v1126, %v1128
    %v1130 = vrot.slane %v1116, %v1129
    %v1131 = vcombine.low %v1108, %v1123
    %v1132 = vcombine.high %v1108, %v1123
    %v1134 = vunpack.c.l.s4 1934713408
    %v1135 = vunpack.c.0.s8 %v1134
    %v1136 = vlaneseq
    %v1137 = vshrl.u32 %v1136, 7
    %v1138 = vsub.s32 %v1135, %v1137
    %v1139 = vrot.slane %v1131, %v1138
    %v1141 = vunpack.c.l.s4 1934713408
    %v1142 = vunpack.c.0.s8 %v1141
    %v1143 = vlaneseq
    %v1144 = vshrl.u32 %v1143, 7
    %v1145 = vsub.s32 %v1142, %v1144
    %v1146 = vrot.slane %v1132, %v1145
    %v1147 = vcombine.low %v1115, %v1130
    %v1148 = vcombine.high %v1115, %v1130
    %v1150 = vunpack.c.l.s4 1934713408
    %v1151 = vunpack.c.0.s8 %v1150
    %v1152 = vlaneseq
    %v1153 = vshrl.u32 %v1152, 7
    %v1154 = vsub.s32 %v1151, %v1153
    %v1155 = vrot.slane %v1147, %v1154
    %v1157 = vunpack.c.l.s4 1934713408
    %v1158 = vunpack.c.0.s8 %v1157
    %v1159 = vlaneseq
    %v1160 = vshrl.u32 %v1159, 7
    %v1161 = vsub.s32 %v1158, %v1160
    %v1162 = vrot.slane %v1148, %v1161
    %v1163 = vcombine.high %v1139, 0.0
    %v1164 = vcombine.high %v1146, 0.0
    %v1165 = vcombine.high %v1155, 0.0
    %v1166 = vcombine.high %v1162, 0.0
    %v1167 = vcombine.high %v109, 0.0
    %v1169 = vunpack.c.l.s4 1983009808
    %v1170 = vunpack.c.0.s8 %v1169
    %v1171 = vlaneseq
    %v1172 = vshrl.u32 %v1171, 7
    %v1173 = vsub.s32 %v1170, %v1172
    %v1174 = vrot.slane %v109, %v1173
    %v1176 = vunpack.c.l.s4 1983009808
    %v1177 = vunpack.c.0.s8 %v1176
    %v1178 = vlaneseq
    %v1179 = vshrl.u32 %v1178, 7
    %v1180 = vsub.s32 %v1177, %v1179
    %v1181 = vrot.slane %v1167, %v1180
    %v1182 = vcombine.high %v176, 0.0
    %v1184 = vunpack.c.l.s4 1983009808
    %v1185 = vunpack.c.0.s8 %v1184
    %v1186 = vlaneseq
    %v1187 = vshrl.u32 %v1186, 7
    %v1188 = vsub.s32 %v1185, %v1187
    %v1189 = vrot.slane %v176, %v1188
    %v1191 = vunpack.c.l.s4 1983009808
    %v1192 = vunpack.c.0.s8 %v1191
    %v1193 = vlaneseq
    %v1194 = vshrl.u32 %v1193, 7
    %v1195 = vsub.s32 %v1192, %v1194
    %v1196 = vrot.slane %v1182, %v1195
    %v1197 = vcombine.low %v1174, %v1189
    %v1198 = vcombine.high %v1174, %v1189
    %v1200 = vunpack.c.l.s4 1934713408
    %v1201 = vunpack.c.0.s8 %v1200
    %v1202 = vlaneseq
    %v1203 = vshrl.u32 %v1202, 7
    %v1204 = vsub.s32 %v1201, %v1203
    %v1205 = vrot.slane %v1197, %v1204
    %v1207 = vunpack.c.l.s4 1934713408
    %v1208 = vunpack.c.0.s8 %v1207
    %v1209 = vlaneseq
    %v1210 = vshrl.u32 %v1209, 7
    %v1211 = vsub.s32 %v1208, %v1210
    %v1212 = vrot.slane %v1198, %v1211
    %v1213 = vcombine.low %v1181, %v1196
    %v1214 = vcombine.high %v1181, %v1196
    %v1216 = vunpack.c.l.s4 1934713408
    %v1217 = vunpack.c.0.s8 %v1216
    %v1218 = vlaneseq
    %v1219 = vshrl.u32 %v1218, 7
    %v1220 = vsub.s32 %v1217, %v1219
    %v1221 = vrot.slane %v1213, %v1220
    %v1223 = vunpack.c.l.s4 1934713408
    %v1224 = vunpack.c.0.s8 %v1223
    %v1225 = vlaneseq
    %v1226 = vshrl.u32 %v1225, 7
    %v1227 = vsub.s32 %v1224, %v1226
    %v1228 = vrot.slane %v1214, %v1227
    %v1229 = vcombine.high %v1205, 0.0
    %v1230 = vcombine.high %v1212, 0.0
    %v1231 = vcombine.high %v1221, 0.0
    %v1232 = vcombine.high %v1228, 0.0
    %1234 = vrot.lane.b32.xlu0 %v239, 49
    %v1235 = vpop.permute.xlu0 %1234
    %1238 = vrot.lane.b32.xlu0 %v222, 98
    %v1239 = vpop.permute.xlu0 %1238
    %1242 = vrot.lane.b32.xlu0 %v240, 19
    %v1243 = vpop.permute.xlu0 %1242
    %1246 = vrot.lane.b32.xlu0 %v231, 68
    %v1247 = vpop.permute.xlu0 %1246
    %1250 = vrot.lane.b32.xlu0 %v241, 117
    %v1251 = vpop.permute.xlu0 %1250
    %1254 = vrot.lane.b32.xlu0 %v238, 38
    %v1255 = vpop.permute.xlu0 %1254
    %1258 = vrot.lane.b32.xlu0 %v242, 87
    %v1259 = vpop.permute.xlu0 %1258
    %1262 = vrot.lane.b32.xlu0 %v281, 8
    %v1263 = vpop.permute.xlu0 %1262
    %1266 = vrot.lane.b32.xlu0 %v305, 57
    %v1267 = vpop.permute.xlu0 %1266
    %1270 = vrot.lane.b32.xlu0 %v288, 106
    %v1271 = vpop.permute.xlu0 %1270
    %1274 = vrot.lane.b32.xlu0 %v306, 27
    %v1275 = vpop.permute.xlu0 %1274
    %1278 = vrot.lane.b32.xlu0 %v297, 76
    %v1279 = vpop.permute.xlu0 %1278
    %1282 = vrot.lane.b32.xlu0 %v307, 125
    %v1283 = vpop.permute.xlu0 %1282
    %1286 = vrot.lane.b32.xlu0 %v304, 46
    %v1287 = vpop.permute.xlu0 %1286
    %1290 = vrot.lane.b32.xlu0 %v308, 95
    %v1291 = vpop.permute.xlu0 %1290
    %1294 = vrot.lane.b32.xlu0 %v347, 16
    %v1295 = vpop.permute.xlu0 %1294
    %1298 = vrot.lane.b32.xlu0 %v371, 65
    %v1299 = vpop.permute.xlu0 %1298
    %1302 = vrot.lane.b32.xlu0 %v354, 114
    %v1303 = vpop.permute.xlu0 %1302
    %1306 = vrot.lane.b32.xlu0 %v372, 35
    %v1307 = vpop.permute.xlu0 %1306
    %1310 = vrot.lane.b32.xlu0 %v363, 84
    %v1311 = vpop.permute.xlu0 %1310
    %1314 = vrot.lane.b32.xlu0 %v373, 5
    %v1315 = vpop.permute.xlu0 %1314
    %1318 = vrot.lane.b32.xlu0 %v370, 54
    %v1319 = vpop.permute.xlu0 %1318
    %1322 = vrot.lane.b32.xlu0 %v374, 103
    %v1323 = vpop.permute.xlu0 %1322
    %1326 = vrot.lane.b32.xlu0 %v413, 24
    %v1327 = vpop.permute.xlu0 %1326
    %1330 = vrot.lane.b32.xlu0 %v437, 73
    %v1331 = vpop.permute.xlu0 %1330
    %1334 = vrot.lane.b32.xlu0 %v420, 122
    %v1335 = vpop.permute.xlu0 %1334
    %1338 = vrot.lane.b32.xlu0 %v438, 43
    %v1339 = vpop.permute.xlu0 %1338
    %1342 = vrot.lane.b32.xlu0 %v429, 92
    %v1343 = vpop.permute.xlu0 %1342
    %1346 = vrot.lane.b32.xlu0 %v439, 13
    %v1347 = vpop.permute.xlu0 %1346
    %1350 = vrot.lane.b32.xlu0 %v436, 62
    %v1351 = vpop.permute.xlu0 %1350
    %1354 = vrot.lane.b32.xlu0 %v440, 111
    %v1355 = vpop.permute.xlu0 %1354
    %1358 = vrot.lane.b32.xlu0 %v479, 32
    %v1359 = vpop.permute.xlu0 %1358
    %1362 = vrot.lane.b32.xlu0 %v503, 81
    %v1363 = vpop.permute.xlu0 %1362
    %1366 = vrot.lane.b32.xlu0 %v486, 2
    %v1367 = vpop.permute.xlu0 %1366
    %1370 = vrot.lane.b32.xlu0 %v504, 51
    %v1371 = vpop.permute.xlu0 %1370
    %1374 = vrot.lane.b32.xlu0 %v495, 100
    %v1375 = vpop.permute.xlu0 %1374
    %1378 = vrot.lane.b32.xlu0 %v505, 21
    %v1379 = vpop.permute.xlu0 %1378
    %1382 = vrot.lane.b32.xlu0 %v502, 70
    %v1383 = vpop.permute.xlu0 %1382
    %1386 = vrot.lane.b32.xlu0 %v506, 119
    %v1387 = vpop.permute.xlu0 %1386
    %1390 = vrot.lane.b32.xlu0 %v545, 40
    %v1391 = vpop.permute.xlu0 %1390
    %1394 = vrot.lane.b32.xlu0 %v569, 89
    %v1395 = vpop.permute.xlu0 %1394
    %1398 = vrot.lane.b32.xlu0 %v552, 10
    %v1399 = vpop.permute.xlu0 %1398
    %1402 = vrot.lane.b32.xlu0 %v570, 59
    %v1403 = vpop.permute.xlu0 %1402
    %1406 = vrot.lane.b32.xlu0 %v561, 108
    %v1407 = vpop.permute.xlu0 %1406
    %1410 = vrot.lane.b32.xlu0 %v571, 29
    %v1411 = vpop.permute.xlu0 %1410
    %1414 = vrot.lane.b32.xlu0 %v568, 78
    %v1415 = vpop.permute.xlu0 %1414
    %1418 = vrot.lane.b32.xlu0 %v572, 127
    %v1419 = vpop.permute.xlu0 %1418
    %1422 = vrot.lane.b32.xlu0 %v611, 48
    %v1423 = vpop.permute.xlu0 %1422
    %1426 = vrot.lane.b32.xlu0 %v635, 97
    %v1427 = vpop.permute.xlu0 %1426
    %1430 = vrot.lane.b32.xlu0 %v618, 18
    %v1431 = vpop.permute.xlu0 %1430
    %1434 = vrot.lane.b32.xlu0 %v636, 67
    %v1435 = vpop.permute.xlu0 %1434
    %1438 = vrot.lane.b32.xlu0 %v627, 116
    %v1439 = vpop.permute.xlu0 %1438
    %1442 = vrot.lane.b32.xlu0 %v637, 37
    %v1443 = vpop.permute.xlu0 %1442
    %1446 = vrot.lane.b32.xlu0 %v634, 86
    %v1447 = vpop.permute.xlu0 %1446
    %1450 = vrot.lane.b32.xlu0 %v638, 7
    %v1451 = vpop.permute.xlu0 %1450
    %1454 = vrot.lane.b32.xlu0 %v677, 56
    %v1455 = vpop.permute.xlu0 %1454
    %1458 = vrot.lane.b32.xlu0 %v701, 105
    %v1459 = vpop.permute.xlu0 %1458
    %1462 = vrot.lane.b32.xlu0 %v684, 26
    %v1463 = vpop.permute.xlu0 %1462
    %1466 = vrot.lane.b32.xlu0 %v702, 75
    %v1467 = vpop.permute.xlu0 %1466
    %1470 = vrot.lane.b32.xlu0 %v693, 124
    %v1471 = vpop.permute.xlu0 %1470
    %1474 = vrot.lane.b32.xlu0 %v703, 45
    %v1475 = vpop.permute.xlu0 %1474
    %1478 = vrot.lane.b32.xlu0 %v700, 94
    %v1479 = vpop.permute.xlu0 %1478
    %1482 = vrot.lane.b32.xlu0 %v704, 15
    %v1483 = vpop.permute.xlu0 %1482
    %1486 = vrot.lane.b32.xlu0 %v743, 64
    %v1487 = vpop.permute.xlu0 %1486
    %1490 = vrot.lane.b32.xlu0 %v767, 113
    %v1491 = vpop.permute.xlu0 %1490
    %1494 = vrot.lane.b32.xlu0 %v750, 34
    %v1495 = vpop.permute.xlu0 %1494
    %1498 = vrot.lane.b32.xlu0 %v768, 83
    %v1499 = vpop.permute.xlu0 %1498
    %1502 = vrot.lane.b32.xlu0 %v759, 4
    %v1503 = vpop.permute.xlu0 %1502
    %1506 = vrot.lane.b32.xlu0 %v769, 53
    %v1507 = vpop.permute.xlu0 %1506
    %1510 = vrot.lane.b32.xlu0 %v766, 102
    %v1511 = vpop.permute.xlu0 %1510
    %1514 = vrot.lane.b32.xlu0 %v770, 23
    %v1515 = vpop.permute.xlu0 %1514
    %1518 = vrot.lane.b32.xlu0 %v809, 72
    %v1519 = vpop.permute.xlu0 %1518
    %1522 = vrot.lane.b32.xlu0 %v833, 121
    %v1523 = vpop.permute.xlu0 %1522
    %1526 = vrot.lane.b32.xlu0 %v816, 42
    %v1527 = vpop.permute.xlu0 %1526
    %1530 = vrot.lane.b32.xlu0 %v834, 91
    %v1531 = vpop.permute.xlu0 %1530
    %1534 = vrot.lane.b32.xlu0 %v825, 12
    %v1535 = vpop.permute.xlu0 %1534
    %1538 = vrot.lane.b32.xlu0 %v835, 61
    %v1539 = vpop.permute.xlu0 %1538
    %1542 = vrot.lane.b32.xlu0 %v832, 110
    %v1543 = vpop.permute.xlu0 %1542
    %1546 = vrot.lane.b32.xlu0 %v836, 31
    %v1547 = vpop.permute.xlu0 %1546
    %1550 = vrot.lane.b32.xlu0 %v875, 80
    %v1551 = vpop.permute.xlu0 %1550
    %1554 = vrot.lane.b32.xlu0 %v899, 1
    %v1555 = vpop.permute.xlu0 %1554
    %1558 = vrot.lane.b32.xlu0 %v882, 50
    %v1559 = vpop.permute.xlu0 %1558
    %1562 = vrot.lane.b32.xlu0 %v900, 99
    %v1563 = vpop.permute.xlu0 %1562
    %1566 = vrot.lane.b32.xlu0 %v891, 20
    %v1567 = vpop.permute.xlu0 %1566
    %1570 = vrot.lane.b32.xlu0 %v901, 69
    %v1571 = vpop.permute.xlu0 %1570
    %1574 = vrot.lane.b32.xlu0 %v898, 118
    %v1575 = vpop.permute.xlu0 %1574
    %1578 = vrot.lane.b32.xlu0 %v902, 39
    %v1579 = vpop.permute.xlu0 %1578
    %1582 = vrot.lane.b32.xlu0 %v941, 88
    %v1583 = vpop.permute.xlu0 %1582
    %1586 = vrot.lane.b32.xlu0 %v965, 9
    %v1587 = vpop.permute.xlu0 %1586
    %1590 = vrot.lane.b32.xlu0 %v948, 58
    %v1591 = vpop.permute.xlu0 %1590
    %1594 = vrot.lane.b32.xlu0 %v966, 107
    %v1595 = vpop.permute.xlu0 %1594
    %1598 = vrot.lane.b32.xlu0 %v957, 28
    %v1599 = vpop.permute.xlu0 %1598
    %1602 = vrot.lane.b32.xlu0 %v967, 77
    %v1603 = vpop.permute.xlu0 %1602
    %1606 = vrot.lane.b32.xlu0 %v964, 126
    %v1607 = vpop.permute.xlu0 %1606
    %1610 = vrot.lane.b32.xlu0 %v968, 47
    %v1611 = vpop.permute.xlu0 %1610
    %1614 = vrot.lane.b32.xlu0 %v1007, 96
    %v1615 = vpop.permute.xlu0 %1614
    %1618 = vrot.lane.b32.xlu0 %v1031, 17
    %v1619 = vpop.permute.xlu0 %1618
    %1622 = vrot.lane.b32.xlu0 %v1014, 66
    %v1623 = vpop.permute.xlu0 %1622
    %1626 = vrot.lane.b32.xlu0 %v1032, 115
    %v1627 = vpop.permute.xlu0 %1626
    %1630 = vrot.lane.b32.xlu0 %v1023, 36
    %v1631 = vpop.permute.xlu0 %1630
    %1634 = vrot.lane.b32.xlu0 %v1033, 85
    %v1635 = vpop.permute.xlu0 %1634
    %1638 = vrot.lane.b32.xlu0 %v1030, 6
    %v1639 = vpop.permute.xlu0 %1638
    %1642 = vrot.lane.b32.xlu0 %v1034, 55
    %v1643 = vpop.permute.xlu0 %1642
    %1646 = vrot.lane.b32.xlu0 %v1073, 104
    %v1647 = vpop.permute.xlu0 %1646
    %1650 = vrot.lane.b32.xlu0 %v1097, 25
    %v1651 = vpop.permute.xlu0 %1650
    %1654 = vrot.lane.b32.xlu0 %v1080, 74
    %v1655 = vpop.permute.xlu0 %1654
    %1658 = vrot.lane.b32.xlu0 %v1098, 123
    %v1659 = vpop.permute.xlu0 %1658
    %1662 = vrot.lane.b32.xlu0 %v1089, 44
    %v1663 = vpop.permute.xlu0 %1662
    %1666 = vrot.lane.b32.xlu0 %v1099, 93
    %v1667 = vpop.permute.xlu0 %1666
    %1670 = vrot.lane.b32.xlu0 %v1096, 14
    %v1671 = vpop.permute.xlu0 %1670
    %1674 = vrot.lane.b32.xlu0 %v1100, 63
    %v1675 = vpop.permute.xlu0 %1674
    %1678 = vrot.lane.b32.xlu0 %v1139, 112
    %v1679 = vpop.permute.xlu0 %1678
    %1682 = vrot.lane.b32.xlu0 %v1163, 33
    %v1683 = vpop.permute.xlu0 %1682
    %1686 = vrot.lane.b32.xlu0 %v1146, 82
    %v1687 = vpop.permute.xlu0 %1686
    %1690 = vrot.lane.b32.xlu0 %v1164, 3
    %v1691 = vpop.permute.xlu0 %1690
    %1694 = vrot.lane.b32.xlu0 %v1155, 52
    %v1695 = vpop.permute.xlu0 %1694
    %1698 = vrot.lane.b32.xlu0 %v1165, 101
    %v1699 = vpop.permute.xlu0 %1698
    %1702 = vrot.lane.b32.xlu0 %v1162, 22
    %v1703 = vpop.permute.xlu0 %1702
    %1706 = vrot.lane.b32.xlu0 %v1166, 71
    %v1707 = vpop.permute.xlu0 %1706
    %1710 = vrot.lane.b32.xlu0 %v1205, 120
    %v1711 = vpop.permute.xlu0 %1710
    %1714 = vrot.lane.b32.xlu0 %v1229, 41
    %v1715 = vpop.permute.xlu0 %1714
    %1718 = vrot.lane.b32.xlu0 %v1212, 90
    %v1719 = vpop.permute.xlu0 %1718
    %1722 = vrot.lane.b32.xlu0 %v1230, 11
    %v1723 = vpop.permute.xlu0 %1722
    %1726 = vrot.lane.b32.xlu0 %v1221, 60
    %v1727 = vpop.permute.xlu0 %1726
    %1730 = vrot.lane.b32.xlu0 %v1231, 109
    %v1731 = vpop.permute.xlu0 %1730
    %1734 = vrot.lane.b32.xlu0 %v1228, 30
    %v1735 = vpop.permute.xlu0 %1734
    %1738 = vrot.lane.b32.xlu0 %v1232, 79
    %v1739 = vpop.permute.xlu0 %1738
    %vm1741 = vcmask 400384
    %v1742 = vsel %vm1741, %v215, %v1235
    %vm1743 = vcmask 801792
    %v1744 = vsel %vm1743, %v1742, %v1239
    %vm1745 = vcmask 154624
    %v1746 = vsel %vm1745, %v1239, %v1243
    %vm1747 = vcmask 556032
    %v1748 = vsel %vm1747, %v1746, %v1247
    %vm1749 = vcmask 957440
    %v1750 = vsel %vm1749, %v1748, %v1251
    %vm1751 = vcmask 310272
    %v1752 = vsel %vm1751, %v1251, %v1255
    %vm1753 = vcmask 711680
    %v1754 = vsel %vm1753, %v1752, %v1259
    %vm1755 = vcmask 64512
    %v1756 = vsel %vm1755, %v1259, %v1263
    %vm1757 = vcmask 465920
    %v1758 = vsel %vm1757, %v1756, %v1267
    %vm1759 = vcmask 867328
    %v1760 = vsel %vm1759, %v1758, %v1271
    %vm1761 = vcmask 220160
    %v1762 = vsel %vm1761, %v1271, %v1275
    %vm1763 = vcmask 621568
    %v1764 = vsel %vm1763, %v1762, %v1279
    %vm1765 = vcmask 1022976
    %v1766 = vsel %vm1765, %v1764, %v1283
    %vm1767 = vcmask 375808
    %v1768 = vsel %vm1767, %v1283, %v1287
    %vm1769 = vcmask 777216
    %v1770 = vsel %vm1769, %v1768, %v1291
    %vm1771 = vcmask 130048
    %v1772 = vsel %vm1771, %v1291, %v1295
    %vm1773 = vcmask 531456
    %v1774 = vsel %vm1773, %v1772, %v1299
    %vm1775 = vcmask 932864
    %v1776 = vsel %vm1775, %v1774, %v1303
    %vm1777 = vcmask 285696
    %v1778 = vsel %vm1777, %v1303, %v1307
    %vm1779 = vcmask 687104
    %v1780 = vsel %vm1779, %v1778, %v1311
    %vm1781 = vcmask 39936
    %v1782 = vsel %vm1781, %v1311, %v1315
    %vm1783 = vcmask 441344
    %v1784 = vsel %vm1783, %v1782, %v1319
    %vm1785 = vcmask 842752
    %v1786 = vsel %vm1785, %v1784, %v1323
    %vm1787 = vcmask 195584
    %v1788 = vsel %vm1787, %v1323, %v1327
    %vm1789 = vcmask 596992
    %v1790 = vsel %vm1789, %v1788, %v1331
    %vm1791 = vcmask 998400
    %v1792 = vsel %vm1791, %v1790, %v1335
    %vm1793 = vcmask 351232
    %v1794 = vsel %vm1793, %v1335, %v1339
    %vm1795 = vcmask 752640
    %v1796 = vsel %vm1795, %v1794, %v1343
    %vm1797 = vcmask 105472
    %v1798 = vsel %vm1797, %v1343, %v1347
    %vm1799 = vcmask 506880
    %v1800 = vsel %vm1799, %v1798, %v1351
    %vm1801 = vcmask 908288
    %v1802 = vsel %vm1801, %v1800, %v1355
    %vm1803 = vcmask 261120
    %v1804 = vsel %vm1803, %v1355, %v1359
    %vm1805 = vcmask 662528
    %v1806 = vsel %vm1805, %v1804, %v1363
    %vm1807 = vcmask 15360
    %v1808 = vsel %vm1807, %v1363, %v1367
    %vm1809 = vcmask 416768
    %v1810 = vsel %vm1809, %v1808, %v1371
    %vm1811 = vcmask 818176
    %v1812 = vsel %vm1811, %v1810, %v1375
    %vm1813 = vcmask 171008
    %v1814 = vsel %vm1813, %v1375, %v1379
    %vm1815 = vcmask 572416
    %v1816 = vsel %vm1815, %v1814, %v1383
    %vm1817 = vcmask 973824
    %v1818 = vsel %vm1817, %v1816, %v1387
    %vm1819 = vcmask 326656
    %v1820 = vsel %vm1819, %v1387, %v1391
    %vm1821 = vcmask 728064
    %v1822 = vsel %vm1821, %v1820, %v1395
    %vm1823 = vcmask 80896
    %v1824 = vsel %vm1823, %v1395, %v1399
    %vm1825 = vcmask 482304
    %v1826 = vsel %vm1825, %v1824, %v1403
    %vm1827 = vcmask 883712
    %v1828 = vsel %vm1827, %v1826, %v1407
    %vm1829 = vcmask 236544
    %v1830 = vsel %vm1829, %v1407, %v1411
    %vm1831 = vcmask 637952
    %v1832 = vsel %vm1831, %v1830, %v1415
    %vm1833 = vcmask 1039360
    %v1834 = vsel %vm1833, %v1832, %v1419
    %vm1835 = vcmask 392192
    %v1836 = vsel %vm1835, %v1419, %v1423
    %vm1837 = vcmask 793600
    %v1838 = vsel %vm1837, %v1836, %v1427
    %vm1839 = vcmask 146432
    %v1840 = vsel %vm1839, %v1427, %v1431
    %vm1841 = vcmask 547840
    %v1842 = vsel %vm1841, %v1840, %v1435
    %vm1843 = vcmask 949248
    %v1844 = vsel %vm1843, %v1842, %v1439
    %vm1845 = vcmask 302080
    %v1846 = vsel %vm1845, %v1439, %v1443
    %vm1847 = vcmask 703488
    %v1848 = vsel %vm1847, %v1846, %v1447
    %vm1849 = vcmask 56320
    %v1850 = vsel %vm1849, %v1447, %v1451
    %vm1851 = vcmask 457728
    %v1852 = vsel %vm1851, %v1850, %v1455
    %vm1853 = vcmask 859136
    %v1854 = vsel %vm1853, %v1852, %v1459
    %vm1855 = vcmask 211968
    %v1856 = vsel %vm1855, %v1459, %v1463
    %vm1857 = vcmask 613376
    %v1858 = vsel %vm1857, %v1856, %v1467
    %vm1859 = vcmask 1014784
    %v1860 = vsel %vm1859, %v1858, %v1471
    %vm1861 = vcmask 367616
    %v1862 = vsel %vm1861, %v1471, %v1475
    %vm1863 = vcmask 769024
    %v1864 = vsel %vm1863, %v1862, %v1479
    %vm1865 = vcmask 121856
    %v1866 = vsel %vm1865, %v1479, %v1483
    %vm1867 = vcmask 523264
    %v1868 = vsel %vm1867, %v1866, %v1487
    %vm1869 = vcmask 924672
    %v1870 = vsel %vm1869, %v1868, %v1491
    %vm1871 = vcmask 277504
    %v1872 = vsel %vm1871, %v1491, %v1495
    %vm1873 = vcmask 678912
    %v1874 = vsel %vm1873, %v1872, %v1499
    %vm1875 = vcmask 31744
    %v1876 = vsel %vm1875, %v1499, %v1503
    %vm1877 = vcmask 433152
    %v1878 = vsel %vm1877, %v1876, %v1507
    %vm1879 = vcmask 834560
    %v1880 = vsel %vm1879, %v1878, %v1511
    %vm1881 = vcmask 187392
    %v1882 = vsel %vm1881, %v1511, %v1515
    %vm1883 = vcmask 588800
    %v1884 = vsel %vm1883, %v1882, %v1519
    %vm1885 = vcmask 990208
    %v1886 = vsel %vm1885, %v1884, %v1523
    %vm1887 = vcmask 343040
    %v1888 = vsel %vm1887, %v1523, %v1527
    %vm1889 = vcmask 744448
    %v1890 = vsel %vm1889, %v1888, %v1531
    %vm1891 = vcmask 97280
    %v1892 = vsel %vm1891, %v1531, %v1535
    %vm1893 = vcmask 498688
    %v1894 = vsel %vm1893, %v1892, %v1539
    %vm1895 = vcmask 900096
    %v1896 = vsel %vm1895, %v1894, %v1543
    %vm1897 = vcmask 252928
    %v1898 = vsel %vm1897, %v1543, %v1547
    %vm1899 = vcmask 654336
    %v1900 = vsel %vm1899, %v1898, %v1551
    %vm1901 = vcmask 7168
    %v1902 = vsel %vm1901, %v1551, %v1555
    %vm1903 = vcmask 408576
    %v1904 = vsel %vm1903, %v1902, %v1559
    %vm1905 = vcmask 809984
    %v1906 = vsel %vm1905, %v1904, %v1563
    %vm1907 = vcmask 162816
    %v1908 = vsel %vm1907, %v1563, %v1567
    %vm1909 = vcmask 564224
    %v1910 = vsel %vm1909, %v1908, %v1571
    %vm1911 = vcmask 965632
    %v1912 = vsel %vm1911, %v1910, %v1575
    %vm1913 = vcmask 318464
    %v1914 = vsel %vm1913, %v1575, %v1579
    %vm1915 = vcmask 719872
    %v1916 = vsel %vm1915, %v1914, %v1583
    %vm1917 = vcmask 72704
    %v1918 = vsel %vm1917, %v1583, %v1587
    %vm1919 = vcmask 474112
    %v1920 = vsel %vm1919, %v1918, %v1591
    %vm1921 = vcmask 875520
    %v1922 = vsel %vm1921, %v1920, %v1595
    %vm1923 = vcmask 228352
    %v1924 = vsel %vm1923, %v1595, %v1599
    %vm1925 = vcmask 629760
    %v1926 = vsel %vm1925, %v1924, %v1603
    %vm1927 = vcmask 1031168
    %v1928 = vsel %vm1927, %v1926, %v1607
    %vm1929 = vcmask 384000
    %v1930 = vsel %vm1929, %v1607, %v1611
    %vm1931 = vcmask 785408
    %v1932 = vsel %vm1931, %v1930, %v1615
    %vm1933 = vcmask 138240
    %v1934 = vsel %vm1933, %v1615, %v1619
    %vm1935 = vcmask 539648
    %v1936 = vsel %vm1935, %v1934, %v1623
    %vm1937 = vcmask 941056
    %v1938 = vsel %vm1937, %v1936, %v1627
    %vm1939 = vcmask 293888
    %v1940 = vsel %vm1939, %v1627, %v1631
    %vm1941 = vcmask 695296
    %v1942 = vsel %vm1941, %v1940, %v1635
    %vm1943 = vcmask 48128
    %v1944 = vsel %vm1943, %v1635, %v1639
    %vm1945 = vcmask 449536
    %v1946 = vsel %vm1945, %v1944, %v1643
    %vm1947 = vcmask 850944
    %v1948 = vsel %vm1947, %v1946, %v1647
    %vm1949 = vcmask 203776
    %v1950 = vsel %vm1949, %v1647, %v1651
    %vm1951 = vcmask 605184
    %v1952 = vsel %vm1951, %v1950, %v1655
    %vm1953 = vcmask 1006592
    %v1954 = vsel %vm1953, %v1952, %v1659
    %vm1955 = vcmask 359424
    %v1956 = vsel %vm1955, %v1659, %v1663
    %vm1957 = vcmask 760832
    %v1958 = vsel %vm1957, %v1956, %v1667
    %vm1959 = vcmask 113664
    %v1960 = vsel %vm1959, %v1667, %v1671
    %vm1961 = vcmask 515072
    %v1962 = vsel %vm1961, %v1960, %v1675
    %vm1963 = vcmask 916480
    %v1964 = vsel %vm1963, %v1962, %v1679
    %vm1965 = vcmask 269312
    %v1966 = vsel %vm1965, %v1679, %v1683
    %vm1967 = vcmask 670720
    %v1968 = vsel %vm1967, %v1966, %v1687
    %vm1969 = vcmask 23552
    %v1970 = vsel %vm1969, %v1687, %v1691
    %vm1971 = vcmask 424960
    %v1972 = vsel %vm1971, %v1970, %v1695
    %vm1973 = vcmask 826368
    %v1974 = vsel %vm1973, %v1972, %v1699
    %vm1975 = vcmask 179200
    %v1976 = vsel %vm1975, %v1699, %v1703
    %vm1977 = vcmask 580608
    %v1978 = vsel %vm1977, %v1976, %v1707
    %vm1979 = vcmask 982016
    %v1980 = vsel %vm1979, %v1978, %v1711
    %vm1981 = vcmask 334848
    %v1982 = vsel %vm1981, %v1711, %v1715
    %vm1983 = vcmask 736256
    %v1984 = vsel %vm1983, %v1982, %v1719
    %vm1985 = vcmask 89088
    %v1986 = vsel %vm1985, %v1719, %v1723
    %vm1987 = vcmask 490496
    %v1988 = vsel %vm1987, %v1986, %v1727
    %vm1989 = vcmask 891904
    %v1990 = vsel %vm1989, %v1988, %v1731
    %vm1991 = vcmask 244736
    %v1992 = vsel %vm1991, %v1731, %v1735
    %vm1993 = vcmask 646144
    %v1994 = vsel %vm1993, %v1992, %v1739
    %v1995 = vld [vmem:[#allocation5] sm:$0xff]
    %v1996 = vld [vmem:[#allocation5 + $0x8] sm:$0xff]
    %v1997 = vld [vmem:[#allocation5 + $0x10] sm:$0xff]
    %v1998 = vld [vmem:[#allocation5 + $0x18] sm:$0xff]
    %v1999 = vld [vmem:[#allocation5 + $0x20] sm:$0xff]
    %v2000 = vld [vmem:[#allocation5 + $0x28] sm:$0xff]
    %v2001 = vld [vmem:[#allocation5 + $0x30] sm:$0xff]
    %v2002 = vld [vmem:[#allocation5 + $0x38] sm:$0xff]
    %v2003 = vld [vmem:[#allocation5 + $0x40] sm:$0xff]
    %v2004 = vld [vmem:[#allocation5 + $0x48] sm:$0xff]
    %v2005 = vld [vmem:[#allocation5 + $0x50] sm:$0xff]
    %v2006 = vld [vmem:[#allocation5 + $0x58] sm:$0xff]
    %v2007 = vld [vmem:[#allocation5 + $0x60] sm:$0x3]
    %v2057 = vcombine.low %v1744, %v1750
    %v2058 = vcombine.low %v1754, %v1760
    %v2060 = vunpack.c.l.s4 1983009808
    %v2061 = vunpack.c.0.s8 %v2060
    %v2062 = vlaneseq
    %v2063 = vshrl.u32 %v2062, 7
    %v2064 = vsub.s32 %v2061, %v2063
    %v2065 = vrot.slane %v2057, %v2064
    %v2067 = vunpack.c.l.s4 1983009808
    %v2068 = vunpack.c.0.s8 %v2067
    %v2069 = vlaneseq
    %v2070 = vshrl.u32 %v2069, 7
    %v2071 = vsub.s32 %v2068, %v2070
    %v2072 = vrot.slane %v2058, %v2071
    %v2073 = vcombine.low %v2065, %v2072
    %v2074 = vcombine.low %v1766, %v1770
    %v2075 = vcombine.low %v1776, %v1780
    %v2077 = vunpack.c.l.s4 1983009808
    %v2078 = vunpack.c.0.s8 %v2077
    %v2079 = vlaneseq
    %v2080 = vshrl.u32 %v2079, 7
    %v2081 = vsub.s32 %v2078, %v2080
    %v2082 = vrot.slane %v2074, %v2081
    %v2084 = vunpack.c.l.s4 1983009808
    %v2085 = vunpack.c.0.s8 %v2084
    %v2086 = vlaneseq
    %v2087 = vshrl.u32 %v2086, 7
    %v2088 = vsub.s32 %v2085, %v2087
    %v2089 = vrot.slane %v2075, %v2088
    %v2090 = vcombine.low %v2082, %v2089
    %v2091 = vcombine.low %v1786, %v1792
    %v2092 = vcombine.low %v1796, %v1802
    %v2094 = vunpack.c.l.s4 1983009808
    %v2095 = vunpack.c.0.s8 %v2094
    %v2096 = vlaneseq
    %v2097 = vshrl.u32 %v2096, 7
    %v2098 = vsub.s32 %v2095, %v2097
    %v2099 = vrot.slane %v2091, %v2098
    %v2101 = vunpack.c.l.s4 1983009808
    %v2102 = vunpack.c.0.s8 %v2101
    %v2103 = vlaneseq
    %v2104 = vshrl.u32 %v2103, 7
    %v2105 = vsub.s32 %v2102, %v2104
    %v2106 = vrot.slane %v2092, %v2105
    %v2107 = vcombine.low %v2099, %v2106
    %v2108 = vcombine.low %v1806, %v1812
    %v2109 = vcombine.low %v1818, %v1822
    %v2111 = vunpack.c.l.s4 1983009808
    %v2112 = vunpack.c.0.s8 %v2111
    %v2113 = vlaneseq
    %v2114 = vshrl.u32 %v2113, 7
    %v2115 = vsub.s32 %v2112, %v2114
    %v2116 = vrot.slane %v2108, %v2115
    %v2118 = vunpack.c.l.s4 1983009808
    %v2119 = vunpack.c.0.s8 %v2118
    %v2120 = vlaneseq
    %v2121 = vshrl.u32 %v2120, 7
    %v2122 = vsub.s32 %v2119, %v2121
    %v2123 = vrot.slane %v2109, %v2122
    %v2124 = vcombine.low %v2116, %v2123
    %v2125 = vcombine.low %v1828, %v1834
    %v2126 = vcombine.low %v1838, %v1844
    %v2128 = vunpack.c.l.s4 1983009808
    %v2129 = vunpack.c.0.s8 %v2128
    %v2130 = vlaneseq
    %v2131 = vshrl.u32 %v2130, 7
    %v2132 = vsub.s32 %v2129, %v2131
    %v2133 = vrot.slane %v2125, %v2132
    %v2135 = vunpack.c.l.s4 1983009808
    %v2136 = vunpack.c.0.s8 %v2135
    %v2137 = vlaneseq
    %v2138 = vshrl.u32 %v2137, 7
    %v2139 = vsub.s32 %v2136, %v2138
    %v2140 = vrot.slane %v2126, %v2139
    %v2141 = vcombine.low %v2133, %v2140
    %v2142 = vcombine.low %v1848, %v1854
    %v2143 = vcombine.low %v1860, %v1864
    %v2145 = vunpack.c.l.s4 1983009808
    %v2146 = vunpack.c.0.s8 %v2145
    %v2147 = vlaneseq
    %v2148 = vshrl.u32 %v2147, 7
    %v2149 = vsub.s32 %v2146, %v2148
    %v2150 = vrot.slane %v2142, %v2149
    %v2152 = vunpack.c.l.s4 1983009808
    %v2153 = vunpack.c.0.s8 %v2152
    %v2154 = vlaneseq
    %v2155 = vshrl.u32 %v2154, 7
    %v2156 = vsub.s32 %v2153, %v2155
    %v2157 = vrot.slane %v2143, %v2156
    %v2158 = vcombine.low %v2150, %v2157
    %v2159 = vcombine.low %v1870, %v1874
    %v2160 = vcombine.low %v1880, %v1886
    %v2162 = vunpack.c.l.s4 1983009808
    %v2163 = vunpack.c.0.s8 %v2162
    %v2164 = vlaneseq
    %v2165 = vshrl.u32 %v2164, 7
    %v2166 = vsub.s32 %v2163, %v2165
    %v2167 = vrot.slane %v2159, %v2166
    %v2169 = vunpack.c.l.s4 1983009808
    %v2170 = vunpack.c.0.s8 %v2169
    %v2171 = vlaneseq
    %v2172 = vshrl.u32 %v2171, 7
    %v2173 = vsub.s32 %v2170, %v2172
    %v2174 = vrot.slane %v2160, %v2173
    %v2175 = vcombine.low %v2167, %v2174
    %v2176 = vcombine.low %v1890, %v1896
    %v2177 = vcombine.low %v1900, %v1906
    %v2179 = vunpack.c.l.s4 1983009808
    %v2180 = vunpack.c.0.s8 %v2179
    %v2181 = vlaneseq
    %v2182 = vshrl.u32 %v2181, 7
    %v2183 = vsub.s32 %v2180, %v2182
    %v2184 = vrot.slane %v2176, %v2183
    %v2186 = vunpack.c.l.s4 1983009808
    %v2187 = vunpack.c.0.s8 %v2186
    %v2188 = vlaneseq
    %v2189 = vshrl.u32 %v2188, 7
    %v2190 = vsub.s32 %v2187, %v2189
    %v2191 = vrot.slane %v2177, %v2190
    %v2192 = vcombine.low %v2184, %v2191
    %v2193 = vcombine.low %v1912, %v1916
    %v2194 = vcombine.low %v1922, %v1928
    %v2196 = vunpack.c.l.s4 1983009808
    %v2197 = vunpack.c.0.s8 %v2196
    %v2198 = vlaneseq
    %v2199 = vshrl.u32 %v2198, 7
    %v2200 = vsub.s32 %v2197, %v2199
    %v2201 = vrot.slane %v2193, %v2200
    %v2203 = vunpack.c.l.s4 1983009808
    %v2204 = vunpack.c.0.s8 %v2203
    %v2205 = vlaneseq
    %v2206 = vshrl.u32 %v2205, 7
    %v2207 = vsub.s32 %v2204, %v2206
    %v2208 = vrot.slane %v2194, %v2207
    %v2209 = vcombine.low %v2201, %v2208
    %v2210 = vcombine.low %v1932, %v1938
    %v2211 = vcombine.low %v1942, %v1948
    %v2213 = vunpack.c.l.s4 1983009808
    %v2214 = vunpack.c.0.s8 %v2213
    %v2215 = vlaneseq
    %v2216 = vshrl.u32 %v2215, 7
    %v2217 = vsub.s32 %v2214, %v2216
    %v2218 = vrot.slane %v2210, %v2217
    %v2220 = vunpack.c.l.s4 1983009808
    %v2221 = vunpack.c.0.s8 %v2220
    %v2222 = vlaneseq
    %v2223 = vshrl.u32 %v2222, 7
    %v2224 = vsub.s32 %v2221, %v2223
    %v2225 = vrot.slane %v2211, %v2224
    %v2226 = vcombine.low %v2218, %v2225
    %v2227 = vcombine.low %v1954, %v1958
    %v2228 = vcombine.low %v1964, %v1968
    %v2230 = vunpack.c.l.s4 1983009808
    %v2231 = vunpack.c.0.s8 %v2230
    %v2232 = vlaneseq
    %v2233 = vshrl.u32 %v2232, 7
    %v2234 = vsub.s32 %v2231, %v2233
    %v2235 = vrot.slane %v2227, %v2234
    %v2237 = vunpack.c.l.s4 1983009808
    %v2238 = vunpack.c.0.s8 %v2237
    %v2239 = vlaneseq
    %v2240 = vshrl.u32 %v2239, 7
    %v2241 = vsub.s32 %v2238, %v2240
    %v2242 = vrot.slane %v2228, %v2241
    %v2243 = vcombine.low %v2235, %v2242
    %v2244 = vcombine.low %v1974, %v1980
    %v2245 = vcombine.low %v1984, %v1990
    %v2247 = vunpack.c.l.s4 1983009808
    %v2248 = vunpack.c.0.s8 %v2247
    %v2249 = vlaneseq
    %v2250 = vshrl.u32 %v2249, 7
    %v2251 = vsub.s32 %v2248, %v2250
    %v2252 = vrot.slane %v2244, %v2251
    %v2254 = vunpack.c.l.s4 1983009808
    %v2255 = vunpack.c.0.s8 %v2254
    %v2256 = vlaneseq
    %v2257 = vshrl.u32 %v2256, 7
    %v2258 = vsub.s32 %v2255, %v2257
    %v2259 = vrot.slane %v2245, %v2258
    %v2260 = vcombine.low %v2252, %v2259
    %v2262 = vunpack.c.l.s4 1983009808
    %v2263 = vunpack.c.0.s8 %v2262
    %v2264 = vlaneseq
    %v2265 = vshrl.u32 %v2264, 7
    %v2266 = vsub.s32 %v2263, %v2265
    %v2267 = vrot.slane %v1994, %v2266
    %v2281 = vmul.f32 %v1995, %v2073
    %v2282 = vmul.f32 %v1996, %v2090
    %v2283 = vmul.f32 %v1997, %v2107
    %v2284 = vmul.f32 %v1998, %v2124
    %v2285 = vmul.f32 %v1999, %v2141
    %v2286 = vmul.f32 %v2000, %v2158
    %v2287 = vmul.f32 %v2001, %v2175
    %v2288 = vmul.f32 %v2002, %v2192
    %v2289 = vmul.f32 %v2003, %v2209
    %v2290 = vmul.f32 %v2004, %v2226
    %v2291 = vmul.f32 %v2005, %v2243
    %v2292 = vmul.f32 %v2006, %v2260
    %v2293 = vmul.f32 %v2007, %v2267
    %2294 = vst [vmem:[#allocation7] sm:$0xff] %v2281
    %2295 = vst [vmem:[#allocation7 + $0x8] sm:$0xff] %v2282
    %2296 = vst [vmem:[#allocation7 + $0x10] sm:$0xff] %v2283
    %2297 = vst [vmem:[#allocation7 + $0x18] sm:$0xff] %v2284
    %2298 = vst [vmem:[#allocation7 + $0x20] sm:$0xff] %v2285
    %2299 = vst [vmem:[#allocation7 + $0x28] sm:$0xff] %v2286
    %2300 = vst [vmem:[#allocation7 + $0x30] sm:$0xff] %v2287
    %2301 = vst [vmem:[#allocation7 + $0x38] sm:$0xff] %v2288
    %2302 = vst [vmem:[#allocation7 + $0x40] sm:$0xff] %v2289
    %2303 = vst [vmem:[#allocation7 + $0x48] sm:$0xff] %v2290
    %2304 = vst [vmem:[#allocation7 + $0x50] sm:$0xff] %v2291
    %2305 = vst [vmem:[#allocation7 + $0x58] sm:$0xff] %v2292
    %2306 = vst [vmem:[#allocation7 + $0x60] sm:$0x3] %v2293
    // Predicated region
    $region18: #{tpu_custom_call.1} parent=1 // pred_check
      _
    $region19: #{tpu_custom_call.1} parent=1 // pred_check_branch
      %2308 = sbr.rel (0) target = $region21
    $region20: #{tpu_custom_call.1} parent=1 // pred_region
      %s2310 = ssub.s32 1568, 1568
      %2311 = vsyncadd [#allocation4], %s2310
      %s2313 = sshll.u32 [#allocation7], 4
      %s2314 = int_to_ptr.vmem [resolvable:$true] %s2313
      %2316 = dma.vmem_to_hbm [thread:$0]  %s2314, 1568, %s2, [#allocation4]
    $region21: #{tpu_custom_call.1} parent=1 // pred_fallthru
      _
    // Predicated region
    $region22: #{tpu_custom_call.1} parent=1 // pred_check
      _
    $region23: #{tpu_custom_call.1} parent=1 // pred_check_branch
      %2318 = sbr.rel (0) target = $region25
    $region24: #{tpu_custom_call.1} parent=1 // pred_region
      %2319 = dma.done [#allocation4], 1568
    $region25: #{tpu_custom_call.1} parent=1 // pred_fallthru
      _
    %2320 = vsyncpa [#allocation3], 1
    %2321 = vsyncpa [#allocation6], 1
    %2322 = vsyncpa [#allocation4], 1

// kernel: tpu_custom_call.1
$region0: #{tpu_custom_call.1}
  #allocation0 [shape = 'u32[]', space=smem, size = 0x4, offset = 0x4, fixed_abs, tag = 'smem constant byte address 0x4 - core index']
  #allocation1 [shape = 'u32[144,128]{1,0:T(1,128)}', space=vmem, size = 0x12000, scoped, tag = 'internal scratch']
  %s0 = inlined_call_operand.vmem [shape: f32[256,1], index: 0, kind: input, shape index: {}]
  %s1 = inlined_call_operand.vmem [shape: f32[256,49], index: 1, kind: input, shape index: {}]
  %s2 = inlined_call_operand.vmem [shape: f32[256,49], index: 2, kind: output, shape index: {}]
  %s3 = sld [smem:[#allocation0]]
  $region18: #{tpu_custom_call.1} parent=0
    _
  %s5 = ssub.s32 1, %s3
  %s6 = scalar_select 0, %s5, %s3
  // Predicated region
  $region2: #{tpu_custom_call.1} parent=0 // pred_check
    _
  $region3: #{tpu_custom_call.1} parent=0 // pred_check_branch
    %8 = sbr.rel (0) target = $region5
  $region4: #{tpu_custom_call.1} parent=0 // pred_region
    _
  $region5: #{tpu_custom_call.1} parent=0 // pred_fallthru
    _
  // Predicated region
  $region6: #{tpu_custom_call.1} parent=0 // pred_check
    _
  $region7: #{tpu_custom_call.1} parent=0 // pred_check_branch
    %10 = sbr.rel (0) target = $region9
  $region8: #{tpu_custom_call.1} parent=0 // pred_region
    _
  $region9: #{tpu_custom_call.1} parent=0 // pred_fallthru
    _
  %v11 = vld [vmem:[%s0] sm:$0xff]
  %v12 = vld [vmem:[%s0 + $0x8] sm:$0xff]
  %v13 = vld [vmem:[%s0 + $0x10] sm:$0xff]
  %v14 = vld [vmem:[%s0 + $0x18] sm:$0xff]
  %v15 = vld [vmem:[%s0 + $0x20] sm:$0xff]
  %v16 = vld [vmem:[%s0 + $0x28] sm:$0xff]
  %v17 = vld [vmem:[%s0 + $0x30] sm:$0xff]
  %v18 = vld [vmem:[%s0 + $0x38] sm:$0xff]
  %v19 = vld [vmem:[%s0 + $0x40] sm:$0xff]
  %v20 = vld [vmem:[%s0 + $0x48] sm:$0xff]
  %v21 = vld [vmem:[%s0 + $0x50] sm:$0xff]
  %v22 = vld [vmem:[%s0 + $0x58] sm:$0xff]
  %v23 = vld [vmem:[%s0 + $0x60] sm:$0xff]
  %v24 = vld [vmem:[%s0 + $0x68] sm:$0xff]
  %v25 = vld [vmem:[%s0 + $0x70] sm:$0xff]
  %v26 = vld [vmem:[%s0 + $0x78] sm:$0xff]
  %v27 = vld [vmem:[%s0 + $0x80] sm:$0xff]
  %v28 = vld [vmem:[%s0 + $0x88] sm:$0xff]
  %v29 = vld [vmem:[%s0 + $0x90] sm:$0xff]
  %v30 = vld [vmem:[%s0 + $0x98] sm:$0xff]
  %v31 = vld [vmem:[%s0 + $0xa0] sm:$0xff]
  %v32 = vld [vmem:[%s0 + $0xa8] sm:$0xff]
  %v33 = vld [vmem:[%s0 + $0xb0] sm:$0xff]
  %v34 = vld [vmem:[%s0 + $0xb8] sm:$0xff]
  %v35 = vld [vmem:[%s0 + $0xc0] sm:$0xff]
  %v36 = vld [vmem:[%s0 + $0xc8] sm:$0xff]
  %v37 = vld [vmem:[%s0 + $0xd0] sm:$0xff]
  %v38 = vld [vmem:[%s0 + $0xd8] sm:$0xff]
  %v39 = vld [vmem:[%s0 + $0xe0] sm:$0xff]
  %v40 = vld [vmem:[%s0 + $0xe8] sm:$0xff]
  %v41 = vld [vmem:[%s0 + $0xf0] sm:$0xff]
  %v42 = vld [vmem:[%s0 + $0xf8] sm:$0xff]
  %v43 = vxor.u32 %v11, 2147483648
  %v44 = vxor.u32 %v12, 2147483648
  %v45 = vxor.u32 %v13, 2147483648
  %v46 = vxor.u32 %v14, 2147483648
  %v47 = vxor.u32 %v15, 2147483648
  %v48 = vxor.u32 %v16, 2147483648
  %v49 = vxor.u32 %v17, 2147483648
  %v50 = vxor.u32 %v18, 2147483648
  %v51 = vxor.u32 %v19, 2147483648
  %v52 = vxor.u32 %v20, 2147483648
  %v53 = vxor.u32 %v21, 2147483648
  %v54 = vxor.u32 %v22, 2147483648
  %v55 = vxor.u32 %v23, 2147483648
  %v56 = vxor.u32 %v24, 2147483648
  %v57 = vxor.u32 %v25, 2147483648
  %v58 = vxor.u32 %v26, 2147483648
  %v59 = vxor.u32 %v27, 2147483648
  %v60 = vxor.u32 %v28, 2147483648
  %v61 = vxor.u32 %v29, 2147483648
  %v62 = vxor.u32 %v30, 2147483648
  %v63 = vxor.u32 %v31, 2147483648
  %v64 = vxor.u32 %v32, 2147483648
  %v65 = vxor.u32 %v33, 2147483648
  %v66 = vxor.u32 %v34, 2147483648
  %v67 = vxor.u32 %v35, 2147483648
  %v68 = vxor.u32 %v36, 2147483648
  %v69 = vxor.u32 %v37, 2147483648
  %v70 = vxor.u32 %v38, 2147483648
  %v71 = vxor.u32 %v39, 2147483648
  %v72 = vxor.u32 %v40, 2147483648
  %v73 = vxor.u32 %v41, 2147483648
  %v74 = vxor.u32 %v42, 2147483648
  %v75 = vmul.f32 %v43, 1.442695
  %v76 = vpow.pop %v75
  %v77 = vmul.f32 %v44, 1.442695
  %v78 = vpow.pop %v77
  %v79 = vmul.f32 %v45, 1.442695
  %v80 = vpow.pop %v79
  %v81 = vmul.f32 %v46, 1.442695
  %v82 = vpow.pop %v81
  %v83 = vmul.f32 %v47, 1.442695
  %v84 = vpow.pop %v83
  %v85 = vmul.f32 %v48, 1.442695
  %v86 = vpow.pop %v85
  %v87 = vmul.f32 %v49, 1.442695
  %v88 = vpow.pop %v87
  %v89 = vmul.f32 %v50, 1.442695
  %v90 = vpow.pop %v89
  %v91 = vmul.f32 %v51, 1.442695
  %v92 = vpow.pop %v91
  %v93 = vmul.f32 %v52, 1.442695
  %v94 = vpow.pop %v93
  %v95 = vmul.f32 %v53, 1.442695
  %v96 = vpow.pop %v95
  %v97 = vmul.f32 %v54, 1.442695
  %v98 = vpow.pop %v97
  %v99 = vmul.f32 %v55, 1.442695
  %v100 = vpow.pop %v99
  %v101 = vmul.f32 %v56, 1.442695
  %v102 = vpow.pop %v101
  %v103 = vmul.f32 %v57, 1.442695
  %v104 = vpow.pop %v103
  %v105 = vmul.f32 %v58, 1.442695
  %v106 = vpow.pop %v105
  %v107 = vmul.f32 %v59, 1.442695
  %v108 = vpow.pop %v107
  %v109 = vmul.f32 %v60, 1.442695
  %v110 = vpow.pop %v109
  %v111 = vmul.f32 %v61, 1.442695
  %v112 = vpow.pop %v111
  %v113 = vmul.f32 %v62, 1.442695
  %v114 = vpow.pop %v113
  %v115 = vmul.f32 %v63, 1.442695
  %v116 = vpow.pop %v115
  %v117 = vmul.f32 %v64, 1.442695
  %v118 = vpow.pop %v117
  %v119 = vmul.f32 %v65, 1.442695
  %v120 = vpow.pop %v119
  %v121 = vmul.f32 %v66, 1.442695
  %v122 = vpow.pop %v121
  %v123 = vmul.f32 %v67, 1.442695
  %v124 = vpow.pop %v123
  %v125 = vmul.f32 %v68, 1.442695
  %v126 = vpow.pop %v125
  %v127 = vmul.f32 %v69, 1.442695
  %v128 = vpow.pop %v127
  %v129 = vmul.f32 %v70, 1.442695
  %v130 = vpow.pop %v129
  %v131 = vmul.f32 %v71, 1.442695
  %v132 = vpow.pop %v131
  %v133 = vmul.f32 %v72, 1.442695
  %v134 = vpow.pop %v133
  %v135 = vmul.f32 %v73, 1.442695
  %v136 = vpow.pop %v135
  %v137 = vmul.f32 %v74, 1.442695
  %v138 = vpow.pop %v137
  %v139 = vadd.f32 %v76, 1.0
  %v140 = vadd.f32 %v78, 1.0
  %v141 = vadd.f32 %v80, 1.0
  %v142 = vadd.f32 %v82, 1.0
  %v143 = vadd.f32 %v84, 1.0
  %v144 = vadd.f32 %v86, 1.0
  %v145 = vadd.f32 %v88, 1.0
  %v146 = vadd.f32 %v90, 1.0
  %v147 = vadd.f32 %v92, 1.0
  %v148 = vadd.f32 %v94, 1.0
  %v149 = vadd.f32 %v96, 1.0
  %v150 = vadd.f32 %v98, 1.0
  %v151 = vadd.f32 %v100, 1.0
  %v152 = vadd.f32 %v102, 1.0
  %v153 = vadd.f32 %v104, 1.0
  %v154 = vadd.f32 %v106, 1.0
  %v155 = vadd.f32 %v108, 1.0
  %v156 = vadd.f32 %v110, 1.0
  %v157 = vadd.f32 %v112, 1.0
  %v158 = vadd.f32 %v114, 1.0
  %v159 = vadd.f32 %v116, 1.0
  %v160 = vadd.f32 %v118, 1.0
  %v161 = vadd.f32 %v120, 1.0
  %v162 = vadd.f32 %v122, 1.0
  %v163 = vadd.f32 %v124, 1.0
  %v164 = vadd.f32 %v126, 1.0
  %v165 = vadd.f32 %v128, 1.0
  %v166 = vadd.f32 %v130, 1.0
  %v167 = vadd.f32 %v132, 1.0
  %v168 = vadd.f32 %v134, 1.0
  %v169 = vadd.f32 %v136, 1.0
  %v170 = vadd.f32 %v138, 1.0
  %v171 = vrcp.pop %v139
  %v172 = vmul.f32 1.0, %v171
  %v173 = vrcp.pop %v140
  %v174 = vmul.f32 1.0, %v173
  %v175 = vrcp.pop %v141
  %v176 = vmul.f32 1.0, %v175
  %v177 = vrcp.pop %v142
  %v178 = vmul.f32 1.0, %v177
  %v179 = vrcp.pop %v143
  %v180 = vmul.f32 1.0, %v179
  %v181 = vrcp.pop %v144
  %v182 = vmul.f32 1.0, %v181
  %v183 = vrcp.pop %v145
  %v184 = vmul.f32 1.0, %v183
  %v185 = vrcp.pop %v146
  %v186 = vmul.f32 1.0, %v185
  %v187 = vrcp.pop %v147
  %v188 = vmul.f32 1.0, %v187
  %v189 = vrcp.pop %v148
  %v190 = vmul.f32 1.0, %v189
  %v191 = vrcp.pop %v149
  %v192 = vmul.f32 1.0, %v191
  %v193 = vrcp.pop %v150
  %v194 = vmul.f32 1.0, %v193
  %v195 = vrcp.pop %v151
  %v196 = vmul.f32 1.0, %v195
  %v197 = vrcp.pop %v152
  %v198 = vmul.f32 1.0, %v197
  %v199 = vrcp.pop %v153
  %v200 = vmul.f32 1.0, %v199
  %v201 = vrcp.pop %v154
  %v202 = vmul.f32 1.0, %v201
  %v203 = vrcp.pop %v155
  %v204 = vmul.f32 1.0, %v203
  %v205 = vrcp.pop %v156
  %v206 = vmul.f32 1.0, %v205
  %v207 = vrcp.pop %v157
  %v208 = vmul.f32 1.0, %v207
  %v209 = vrcp.pop %v158
  %v210 = vmul.f32 1.0, %v209
  %v211 = vrcp.pop %v159
  %v212 = vmul.f32 1.0, %v211
  %v213 = vrcp.pop %v160
  %v214 = vmul.f32 1.0, %v213
  %v215 = vrcp.pop %v161
  %v216 = vmul.f32 1.0, %v215
  %v217 = vrcp.pop %v162
  %v218 = vmul.f32 1.0, %v217
  %v219 = vrcp.pop %v163
  %v220 = vmul.f32 1.0, %v219
  %v221 = vrcp.pop %v164
  %v222 = vmul.f32 1.0, %v221
  %v223 = vrcp.pop %v165
  %v224 = vmul.f32 1.0, %v223
  %v225 = vrcp.pop %v166
  %v226 = vmul.f32 1.0, %v225
  %v227 = vrcp.pop %v167
  %v228 = vmul.f32 1.0, %v227
  %v229 = vrcp.pop %v168
  %v230 = vmul.f32 1.0, %v229
  %v231 = vrcp.pop %v169
  %v232 = vmul.f32 1.0, %v231
  %v233 = vrcp.pop %v170
  %v234 = vmul.f32 1.0, %v233
  %v235 = vld [vmem:[%s1] sm:$0xff]
  %v236 = vld [vmem:[%s1 + $0x8] sm:$0xff]
  %v237 = vld [vmem:[%s1 + $0x10] sm:$0xff]
  %v238 = vld [vmem:[%s1 + $0x18] sm:$0xff]
  %v239 = vld [vmem:[%s1 + $0x20] sm:$0xff]
  %v240 = vld [vmem:[%s1 + $0x28] sm:$0xff]
  %v241 = vld [vmem:[%s1 + $0x30] sm:$0xff]
  %v242 = vld [vmem:[%s1 + $0x38] sm:$0xff]
  %v243 = vld [vmem:[%s1 + $0x40] sm:$0xff]
  %v244 = vld [vmem:[%s1 + $0x48] sm:$0xff]
  %v245 = vld [vmem:[%s1 + $0x50] sm:$0xff]
  %v246 = vld [vmem:[%s1 + $0x58] sm:$0xff]
  %v247 = vld [vmem:[%s1 + $0x60] sm:$0xff]
  %v248 = vld [vmem:[%s1 + $0x68] sm:$0xff]
  %v249 = vld [vmem:[%s1 + $0x70] sm:$0xff]
  %v250 = vld [vmem:[%s1 + $0x78] sm:$0xff]
  %v251 = vld [vmem:[%s1 + $0x80] sm:$0xff]
  %v252 = vld [vmem:[%s1 + $0x88] sm:$0xff]
  %v253 = vld [vmem:[%s1 + $0x90] sm:$0xff]
  %v254 = vld [vmem:[%s1 + $0x98] sm:$0xff]
  %v255 = vld [vmem:[%s1 + $0xa0] sm:$0xff]
  %v256 = vld [vmem:[%s1 + $0xa8] sm:$0xff]
  %v257 = vld [vmem:[%s1 + $0xb0] sm:$0xff]
  %v258 = vld [vmem:[%s1 + $0xb8] sm:$0xff]
  %v259 = vld [vmem:[%s1 + $0xc0] sm:$0xff]
  %v260 = vld [vmem:[%s1 + $0xc8] sm:$0xff]
  %v261 = vld [vmem:[%s1 + $0xd0] sm:$0xff]
  %v262 = vld [vmem:[%s1 + $0xd8] sm:$0xff]
  %v263 = vld [vmem:[%s1 + $0xe0] sm:$0xff]
  %v264 = vld [vmem:[%s1 + $0xe8] sm:$0xff]
  %v265 = vld [vmem:[%s1 + $0xf0] sm:$0xff]
  %v266 = vld [vmem:[%s1 + $0xf8] sm:$0xff]
  %268 = vset.pattern.permute.xlu0 0
  %269 = vperm.xlu0 %268, %v172
  %v270 = vpop.permute.xlu0 %269
  %273 = vset.pattern.permute.xlu0 0
  %274 = vperm.xlu0 %273, %v174
  %v275 = vpop.permute.xlu0 %274
  %278 = vset.pattern.permute.xlu0 0
  %279 = vperm.xlu0 %278, %v176
  %v280 = vpop.permute.xlu0 %279
  %283 = vset.pattern.permute.xlu0 0
  %284 = vperm.xlu0 %283, %v178
  %v285 = vpop.permute.xlu0 %284
  %288 = vset.pattern.permute.xlu0 0
  %289 = vperm.xlu0 %288, %v180
  %v290 = vpop.permute.xlu0 %289
  %293 = vset.pattern.permute.xlu0 0
  %294 = vperm.xlu0 %293, %v182
  %v295 = vpop.permute.xlu0 %294
  %298 = vset.pattern.permute.xlu0 0
  %299 = vperm.xlu0 %298, %v184
  %v300 = vpop.permute.xlu0 %299
  %303 = vset.pattern.permute.xlu0 0
  %304 = vperm.xlu0 %303, %v186
  %v305 = vpop.permute.xlu0 %304
  %308 = vset.pattern.permute.xlu0 0
  %309 = vperm.xlu0 %308, %v188
  %v310 = vpop.permute.xlu0 %309
  %313 = vset.pattern.permute.xlu0 0
  %314 = vperm.xlu0 %313, %v190
  %v315 = vpop.permute.xlu0 %314
  %318 = vset.pattern.permute.xlu0 0
  %319 = vperm.xlu0 %318, %v192
  %v320 = vpop.permute.xlu0 %319
  %323 = vset.pattern.permute.xlu0 0
  %324 = vperm.xlu0 %323, %v194
  %v325 = vpop.permute.xlu0 %324
  %328 = vset.pattern.permute.xlu0 0
  %329 = vperm.xlu0 %328, %v196
  %v330 = vpop.permute.xlu0 %329
  %333 = vset.pattern.permute.xlu0 0
  %334 = vperm.xlu0 %333, %v198
  %v335 = vpop.permute.xlu0 %334
  %338 = vset.pattern.permute.xlu0 0
  %339 = vperm.xlu0 %338, %v200
  %v340 = vpop.permute.xlu0 %339
  %343 = vset.pattern.permute.xlu0 0
  %344 = vperm.xlu0 %343, %v202
  %v345 = vpop.permute.xlu0 %344
  %348 = vset.pattern.permute.xlu0 0
  %349 = vperm.xlu0 %348, %v204
  %v350 = vpop.permute.xlu0 %349
  %353 = vset.pattern.permute.xlu0 0
  %354 = vperm.xlu0 %353, %v206
  %v355 = vpop.permute.xlu0 %354
  %358 = vset.pattern.permute.xlu0 0
  %359 = vperm.xlu0 %358, %v208
  %v360 = vpop.permute.xlu0 %359
  %363 = vset.pattern.permute.xlu0 0
  %364 = vperm.xlu0 %363, %v210
  %v365 = vpop.permute.xlu0 %364
  %368 = vset.pattern.permute.xlu0 0
  %369 = vperm.xlu0 %368, %v212
  %v370 = vpop.permute.xlu0 %369
  %373 = vset.pattern.permute.xlu0 0
  %374 = vperm.xlu0 %373, %v214
  %v375 = vpop.permute.xlu0 %374
  %378 = vset.pattern.permute.xlu0 0
  %379 = vperm.xlu0 %378, %v216
  %v380 = vpop.permute.xlu0 %379
  %383 = vset.pattern.permute.xlu0 0
  %384 = vperm.xlu0 %383, %v218
  %v385 = vpop.permute.xlu0 %384
  %388 = vset.pattern.permute.xlu0 0
  %389 = vperm.xlu0 %388, %v220
  %v390 = vpop.permute.xlu0 %389
  %393 = vset.pattern.permute.xlu0 0
  %394 = vperm.xlu0 %393, %v222
  %v395 = vpop.permute.xlu0 %394
  %398 = vset.pattern.permute.xlu0 0
  %399 = vperm.xlu0 %398, %v224
  %v400 = vpop.permute.xlu0 %399
  %403 = vset.pattern.permute.xlu0 0
  %404 = vperm.xlu0 %403, %v226
  %v405 = vpop.permute.xlu0 %404
  %408 = vset.pattern.permute.xlu0 0
  %409 = vperm.xlu0 %408, %v228
  %v410 = vpop.permute.xlu0 %409
  %413 = vset.pattern.permute.xlu0 0
  %414 = vperm.xlu0 %413, %v230
  %v415 = vpop.permute.xlu0 %414
  %418 = vset.pattern.permute.xlu0 0
  %419 = vperm.xlu0 %418, %v232
  %v420 = vpop.permute.xlu0 %419
  %423 = vset.pattern.permute.xlu0 0
  %424 = vperm.xlu0 %423, %v234
  %v425 = vpop.permute.xlu0 %424
  %v427 = vmul.f32 %v235, %v270
  %v428 = vmul.f32 %v236, %v275
  %v429 = vmul.f32 %v237, %v280
  %v430 = vmul.f32 %v238, %v285
  %v431 = vmul.f32 %v239, %v290
  %v432 = vmul.f32 %v240, %v295
  %v433 = vmul.f32 %v241, %v300
  %v434 = vmul.f32 %v242, %v305
  %v435 = vmul.f32 %v243, %v310
  %v436 = vmul.f32 %v244, %v315
  %v437 = vmul.f32 %v245, %v320
  %v438 = vmul.f32 %v246, %v325
  %v439 = vmul.f32 %v247, %v330
  %v440 = vmul.f32 %v248, %v335
  %v441 = vmul.f32 %v249, %v340
  %v442 = vmul.f32 %v250, %v345
  %v443 = vmul.f32 %v251, %v350
  %v444 = vmul.f32 %v252, %v355
  %v445 = vmul.f32 %v253, %v360
  %v446 = vmul.f32 %v254, %v365
  %v447 = vmul.f32 %v255, %v370
  %v448 = vmul.f32 %v256, %v375
  %v449 = vmul.f32 %v257, %v380
  %v450 = vmul.f32 %v258, %v385
  %v451 = vmul.f32 %v259, %v390
  %v452 = vmul.f32 %v260, %v395
  %v453 = vmul.f32 %v261, %v400
  %v454 = vmul.f32 %v262, %v405
  %v455 = vmul.f32 %v263, %v410
  %v456 = vmul.f32 %v264, %v415
  %v457 = vmul.f32 %v265, %v420
  %v458 = vmul.f32 %v266, %v425
  %vm459 = vcmask 400384
  %460 = vst.msk [vmem:[%s2] sm:$0xff] %vm459, %v427
  %461 = vst.msk [vmem:[%s2 + $0x8] sm:$0xff] %vm459, %v428
  %462 = vst.msk [vmem:[%s2 + $0x10] sm:$0xff] %vm459, %v429
  %463 = vst.msk [vmem:[%s2 + $0x18] sm:$0xff] %vm459, %v430
  %464 = vst.msk [vmem:[%s2 + $0x20] sm:$0xff] %vm459, %v431
  %465 = vst.msk [vmem:[%s2 + $0x28] sm:$0xff] %vm459, %v432
  %466 = vst.msk [vmem:[%s2 + $0x30] sm:$0xff] %vm459, %v433
  %467 = vst.msk [vmem:[%s2 + $0x38] sm:$0xff] %vm459, %v434
  %468 = vst.msk [vmem:[%s2 + $0x40] sm:$0xff] %vm459, %v435
  %469 = vst.msk [vmem:[%s2 + $0x48] sm:$0xff] %vm459, %v436
  %470 = vst.msk [vmem:[%s2 + $0x50] sm:$0xff] %vm459, %v437
  %471 = vst.msk [vmem:[%s2 + $0x58] sm:$0xff] %vm459, %v438
  %472 = vst.msk [vmem:[%s2 + $0x60] sm:$0xff] %vm459, %v439
  %473 = vst.msk [vmem:[%s2 + $0x68] sm:$0xff] %vm459, %v440
  %474 = vst.msk [vmem:[%s2 + $0x70] sm:$0xff] %vm459, %v441
  %475 = vst.msk [vmem:[%s2 + $0x78] sm:$0xff] %vm459, %v442
  %476 = vst.msk [vmem:[%s2 + $0x80] sm:$0xff] %vm459, %v443
  %477 = vst.msk [vmem:[%s2 + $0x88] sm:$0xff] %vm459, %v444
  %478 = vst.msk [vmem:[%s2 + $0x90] sm:$0xff] %vm459, %v445
  %479 = vst.msk [vmem:[%s2 + $0x98] sm:$0xff] %vm459, %v446
  %480 = vst.msk [vmem:[%s2 + $0xa0] sm:$0xff] %vm459, %v447
  %481 = vst.msk [vmem:[%s2 + $0xa8] sm:$0xff] %vm459, %v448
  %482 = vst.msk [vmem:[%s2 + $0xb0] sm:$0xff] %vm459, %v449
  %483 = vst.msk [vmem:[%s2 + $0xb8] sm:$0xff] %vm459, %v450
  %484 = vst.msk [vmem:[%s2 + $0xc0] sm:$0xff] %vm459, %v451
  %485 = vst.msk [vmem:[%s2 + $0xc8] sm:$0xff] %vm459, %v452
  %486 = vst.msk [vmem:[%s2 + $0xd0] sm:$0xff] %vm459, %v453
  %487 = vst.msk [vmem:[%s2 + $0xd8] sm:$0xff] %vm459, %v454
  %488 = vst.msk [vmem:[%s2 + $0xe0] sm:$0xff] %vm459, %v455
  %489 = vst.msk [vmem:[%s2 + $0xe8] sm:$0xff] %vm459, %v456
  %490 = vst.msk [vmem:[%s2 + $0xf0] sm:$0xff] %vm459, %v457
  %491 = vst.msk [vmem:[%s2 + $0xf8] sm:$0xff] %vm459, %v458
  // Predicated region
  $region10: #{tpu_custom_call.1} parent=0 // pred_check
    _
  $region11: #{tpu_custom_call.1} parent=0 // pred_check_branch
    %493 = sbr.rel (0) target = $region13
  $region12: #{tpu_custom_call.1} parent=0 // pred_region
    _
  $region13: #{tpu_custom_call.1} parent=0 // pred_fallthru
    _
  // Predicated region
  $region14: #{tpu_custom_call.1} parent=0 // pred_check
    _
  $region15: #{tpu_custom_call.1} parent=0 // pred_check_branch
    %495 = sbr.rel (0) target = $region17
  $region16: #{tpu_custom_call.1} parent=0 // pred_region
    _
  $region17: #{tpu_custom_call.1} parent=0 // pred_fallthru
    _

</llo_original>
